<compile_context>
chip_gen: v7x
topology: tpu7x:2x2x1
jax: 0.10.0
libtpu: 0.0.40
codegen_flags: <defaults>
</compile_context>

<pallas_src>
import functools

import jax
import jax.numpy as jnp
from jax.experimental import pallas as pl
from jax.experimental.pallas import tpu as pltpu


def _round_up(x, m):
    return ((x + m - 1) // m) * m


def _auto_band_rows(H, W, NT, max_vertical_flow=64):
    """Heuristic band height: rows spanned by one raster chunk plus a vertical-flow margin."""
    if H % 8 != 0:
        return None
    rows = pl.cdiv(NT, W) + 2 + 2 * max_vertical_flow
    for mult in (128, 8):   # 128-multiples are MXU-tile friendlier; 8 is the alignment minimum
        hc = _round_up(rows, mult)
        if hc < H:
            return hc
    return None             # band would not be smaller than H -> no benefit


def _occu_kernel(row_lo_ref, row_hi_ref, x_ref, y_ref, map_ref, mask_ref, acc_ref,
                 *, H, W, th, band_rows, use_band, precision):
    k = pl.program_id(1)

    @pl.when(k == 0)
    def _init():
        acc_ref[...] = jnp.zeros_like(acc_ref)

    # ---- x side: source points on sublanes -> X built directly as (NT, W), lane-dense in W ---
    xq = x_ref[0]                                       # (NT, 1) f32 : x = col + flow[:, 1]
    x1 = jnp.floor(xq)
    x_floor = jnp.clip(x1, 0.0, float(W - 1))
    x0 = x1 + 1.0
    x_ceil = jnp.clip(x0, 0.0, float(W - 1))
    # corners whose clamp moved them contribute exactly 0 (reference zeroes "invalid" values)
    wxf = jnp.where(x1 == x_floor, 1.0 - jnp.abs(xq - x_floor), 0.0)
    wxc = jnp.where(x0 == x_ceil, 1.0 - jnp.abs(xq - x_ceil), 0.0)

    w_iota = jax.lax.broadcasted_iota(jnp.int32, (1, W), 1).astype(jnp.float32)
    # coincident (clamped) corners add, matching scatter_add semantics
    xmat = (jnp.where(w_iota == x_ceil, wxc, 0.0)
            + jnp.where(w_iota == x_floor, wxf, 0.0))   # (NT, W)

    # ---- y side: source points on lanes -------------------------------------------------------
    yq = y_ref[0]                                       # (1, NT) f32 : y = row + flow[:, 0]
    y1 = jnp.floor(yq)
    y_floor = jnp.clip(y1, 0.0, float(H - 1))
    y0 = y1 + 1.0
    y_ceil = jnp.clip(y0, 0.0, float(H - 1))
    wyf = jnp.where(y1 == y_floor, 1.0 - jnp.abs(yq - y_floor), 0.0)
    wyc = jnp.where(y0 == y_ceil, 1.0 - jnp.abs(yq - y_ceil), 0.0)

    def splat(rows, row_start):
        h_iota = (jax.lax.broadcasted_iota(jnp.int32, (rows, 1), 0).astype(jnp.float32)
                  + row_start)
        ymat = (jnp.where(h_iota == y_ceil, wyc, 0.0)
                + jnp.where(h_iota == y_floor, wyf, 0.0))       # (rows, NT)
        # out[r, w] += sum_p ymat[r, p] * xmat[p, w] : native MXU orientation, no transpose.
        return jax.lax.dot_general(ymat, xmat, (((1,), (0,)), ((), ())),
                                   preferred_element_type=jnp.float32,
                                   precision=precision)

    if use_band:
        b = pl.program_id(0)
        lo = row_lo_ref[b, k]                       # min clamped floor-row of this chunk
        hi = row_hi_ref[b, k]                       # max clamped ceil-row of this chunk
        start = jnp.minimum((lo // 8) * 8, H - band_rows)   # 8-aligned, in range
        start = pl.multiple_of(start, 8)
        fits = (hi - start) < band_rows

        @pl.when(fits)
        def _banded():
            acc_ref[pl.ds(start, band_rows), :] += splat(band_rows, start.astype(jnp.float32))

        @pl.when(jnp.logical_not(fits))
        def _full():
            acc_ref[...] += splat(H, 0.0)
    else:
        acc_ref[...] += splat(H, 0.0)

    @pl.when(k == pl.num_programs(1) - 1)
    def _finalize():
        a = acc_ref[...]
        map_ref[0] = a
        mask_ref[0] = (a > th).astype(jnp.float32)


def get_occu_mask_backward(flow, th=0.95, *, max_chunk=1024, band_rows=None,
                           precision=jax.lax.Precision.HIGHEST):
    """flow: (B, 2, H, W) float32. Returns (occu_mask, occu_map), each (B, 1, H, W)."""
    B, C, H, W = flow.shape
    assert C == 2
    HW = H * W

    # NT = source-point chunk size; keep it moderate (v7x has only 64 MiB VMEM per TC) and pad
    # HW up to a multiple of NT with zero-weight sentinel points for odd image sizes.
    NT = min(_round_up(max_chunk, 128), _round_up(HW, 128))
    HW_pad = _round_up(HW, NT)
    n_chunks = HW_pad // NT

    flow = flow.astype(jnp.float32)
    # The module's registered `grid` buffer + flow with the [1, 0] channel swap:
    row = jnp.arange(H, dtype=jnp.float32)[:, None]
    col = jnp.arange(W, dtype=jnp.float32)[None, :]
    x = (col + flow[:, 1]).reshape(B, HW)       # data[:, 0] of get_corresponding_map
    y = (row + flow[:, 0]).reshape(B, HW)       # data[:, 1]

    pad = HW_pad - HW
    if pad:
        sentinel = jnp.full((B, pad), -1e6, dtype=jnp.float32)   # all 4 corners clamp -> weight 0
        x = jnp.concatenate([x, sentinel], axis=1)
        y = jnp.concatenate([y, sentinel], axis=1)

    # Per-chunk row bands (scalar-prefetched into SMEM; drive the banded MXU path).
    y_ch = y.reshape(B, n_chunks, NT)
    y1 = jnp.floor(y_ch)
    row_lo = jnp.min(jnp.clip(y1, 0.0, H - 1.0), axis=-1).astype(jnp.int32)        # (B, n_chunks)
    row_hi = jnp.max(jnp.clip(y1 + 1.0, 0.0, H - 1.0), axis=-1).astype(jnp.int32)  # (B, n_chunks)

    x_pts = x.reshape(B, HW_pad, 1)    # points on sublanes -> (NT, W) X build, no transpose
    y_pts = y.reshape(B, 1, HW_pad)    # points on lanes    -> (rows, NT) Y build

    if band_rows is None:
        band_rows = _auto_band_rows(H, W, NT)
    use_band = (band_rows is not None and band_rows % 8 == 0
                and 0 < band_rows < H and H % 8 == 0)
    if not use_band:
        band_rows = H   # unused

    kern = functools.partial(_occu_kernel, H=H, W=W, th=float(th),
                             band_rows=band_rows, use_band=use_band, precision=precision)
    occu_map, occu_mask = pl.pallas_call(
        kern,
        out_shape=(jax.ShapeDtypeStruct((B, H, W), jnp.float32),
                   jax.ShapeDtypeStruct((B, H, W), jnp.float32)),
        grid_spec=pltpu.PrefetchScalarGridSpec(
            num_scalar_prefetch=2,                               # row_lo, row_hi -> SMEM
            grid=(B, n_chunks),
            in_specs=[
                pl.BlockSpec((1, NT, 1), lambda b, k, lo, hi: (b, k, 0)),   # x, sublane points
                pl.BlockSpec((1, 1, NT), lambda b, k, lo, hi: (b, 0, k)),   # y, lane points
            ],
            out_specs=(
                pl.BlockSpec((1, H, W), lambda b, k, lo, hi: (b, 0, 0)),
                pl.BlockSpec((1, H, W), lambda b, k, lo, hi: (b, 0, 0)),
            ),
            scratch_shapes=[pltpu.VMEM((H, W), jnp.float32)],
        ),
        compiler_params=pltpu.CompilerParams(
            dimension_semantics=("parallel", "arbitrary"),
            # NT=1024 keeps the (rows,NT)/(NT,W) intermediates small; 64 MiB has headroom on
            # v5e/v6e (128 MiB physical) and is the per-TC ceiling on v7x.
            vmem_limit_bytes=64 * 1024 * 1024,
        ),
    )(row_lo, row_hi, x_pts, y_pts)

    occu_map = occu_map.reshape(B, 1, H, W)
    occu_mask = occu_mask.reshape(B, 1, H, W)
    return occu_mask, occu_map


def _reference(flow, th=0.95):
    """Pure-JAX reference mirroring the PyTorch module (scatter_add based)."""
    B, _, H, W = flow.shape
    row = jnp.arange(H, dtype=jnp.float32)[:, None]
    col = jnp.arange(W, dtype=jnp.float32)[None, :]
    x = (col + flow[:, 1]).reshape(B, -1)
    y = (row + flow[:, 0]).reshape(B, -1)
    x1 = jnp.floor(x); x_floor = jnp.clip(x1, 0, W - 1)
    y1 = jnp.floor(y); y_floor = jnp.clip(y1, 0, H - 1)
    x0 = x1 + 1; x_ceil = jnp.clip(x0, 0, W - 1)
    y0 = y1 + 1; y_ceil = jnp.clip(y0, 0, H - 1)
    xco, yco, xfo, yfo = x0 != x_ceil, y0 != y_ceil, x1 != x_floor, y1 != y_floor
    invalid = jnp.concatenate([xco | yco, xco | yfo, xfo | yco, xfo | yfo], axis=1)
    indices = jnp.concatenate([x_ceil + y_ceil * W, x_ceil + y_floor * W,
                               x_floor + y_ceil * W, x_floor + y_floor * W],
                              axis=1).astype(jnp.int32)
    values = jnp.concatenate([(1 - jnp.abs(x - x_ceil)) * (1 - jnp.abs(y - y_ceil)),
                              (1 - jnp.abs(x - x_ceil)) * (1 - jnp.abs(y - y_floor)),
                              (1 - jnp.abs(x - x_floor)) * (1 - jnp.abs(y - y_ceil)),
                              (1 - jnp.abs(x - x_floor)) * (1 - jnp.abs(y - y_floor))],
                             axis=1)
    values = jnp.where(invalid, 0.0, values)
    corr = jax.vmap(lambda ind, val: jnp.zeros((H * W,), jnp.float32).at[ind].add(val))(
        indices, values).reshape(B, 1, H, W)
    return (corr > th).astype(jnp.float32), corr


if __name__ == "__main__":
    key = jax.random.PRNGKey(0)
    k1, k2 = jax.random.split(key)
    th = 0.95

    # Test 1: small image, single chunk, plain full-H path.
    B, H, W = 2, 16, 16
    flow = jax.random.normal(k1, (B, 2, H, W), dtype=jnp.float32) * 1.5
    occu_mask, occu_map = get_occu_mask_backward(flow, th=th)
    jax.block_until_ready((occu_mask, occu_map))
    ref_mask, ref_map = _reference(flow, th=th)
    assert occu_map.shape == (B, 1, H, W) and occu_mask.shape == (B, 1, H, W)
    assert jnp.allclose(occu_map, ref_map, atol=1e-4, rtol=1e-4), "occu_map mismatch (test 1)"
    near_th = jnp.abs(ref_map - th) < 1e-4           # mask may differ only exactly on threshold
    assert bool(jnp.all((occu_mask == ref_mask) | near_th)), "occu_mask mismatch (test 1)"

    # Test 2: multi-chunk with the banded-accumulation path; one large vertical displacement
    # forces the full-H fallback for its chunk, so both pl.when branches are exercised.
    B2, H2, W2 = 1, 64, 128
    flow2 = jax.random.normal(k2, (B2, 2, H2, W2), dtype=jnp.float32)
    flow2 = flow2.at[0, 0, 10, 20].set(37.0)
    occu_mask2, occu_map2 = get_occu_mask_backward(flow2, th=th, band_rows=32)
    jax.block_until_ready((occu_mask2, occu_map2))
    ref_mask2, ref_map2 = _reference(flow2, th=th)
    assert jnp.allclose(occu_map2, ref_map2, atol=1e-4, rtol=1e-4), "occu_map mismatch (test 2)"
    near_th2 = jnp.abs(ref_map2 - th) < 1e-4
    assert bool(jnp.all((occu_mask2 == ref_mask2) | near_th2)), "occu_mask mismatch (test 2)"

    print("KERNEL_OK")
</pallas_src>

<mosaic_0001>
module attributes {stable_mosaic.version = 11 : i64} {
  func.func @_occu_kernel(%arg0: i32, %arg1: i32, %arg2: memref<2x1xi32, #tpu.memory_space<smem>>, %arg3: memref<2x1xi32, #tpu.memory_space<smem>>, %arg4: memref<1x256x1xf32, #tpu.memory_space<vmem>>, %arg5: memref<1x1x256xf32, #tpu.memory_space<vmem>>, %arg6: memref<1x16x16xf32, #tpu.memory_space<vmem>>, %arg7: memref<1x16x16xf32, #tpu.memory_space<vmem>>, %arg8: memref<16x16xf32, #tpu.memory_space<vmem>>) attributes {dimension_semantics = [#tpu.dimension_semantics<parallel>, #tpu.dimension_semantics<arbitrary>], iteration_bounds = array<i64: 2, 1>, scalar_prefetch = 2 : i64, scratch_operands = 1 : i64, tpu.core_type = #tpu.core_type<tc>, window_params = [{transform_indices = @transform_0, window_bounds = array<i64: 1, 256, 1>}, {transform_indices = @transform_1, window_bounds = array<i64: 1, 1, 256>}, {transform_indices = @transform_2, window_bounds = array<i64: 1, 16, 16>}, {transform_indices = @transform_3, window_bounds = array<i64: 1, 16, 16>}]} {
    %c0_i32 = arith.constant 0 : i32
    %0 = arith.cmpi eq, %arg1, %c0_i32 : i32
    %1 = arith.extui %0 : i1 to i32
    %c0_i32_0 = arith.constant 0 : i32
    %2 = arith.cmpi ne, %1, %c0_i32_0 : i32
    scf.if %2 {
      %cst_35 = arith.constant 0.000000e+00 : f32
      %100 = vector.broadcast %cst_35 : f32 to vector<16x16xf32>
      %c0_36 = arith.constant 0 : index
      %c0_37 = arith.constant 0 : index
      %101 = vector.load %arg8[%c0_36, %c0_37] : memref<16x16xf32, #tpu.memory_space<vmem>>, vector<16x16xf32>
      tpu.vector_store %arg8[%c0_36, %c0_37], %100 {strides = array<i32>} : memref<16x16xf32, #tpu.memory_space<vmem>>, vector<16x16xf32>,
    } else {
    }
    %c0 = arith.constant 0 : index
    %c0_1 = arith.constant 0 : index
    %c0_2 = arith.constant 0 : index
    %3 = vector.load %arg4[%c0, %c0_1, %c0_2] : memref<1x256x1xf32, #tpu.memory_space<vmem>>, vector<1x256x1xf32>
    %4 = vector.shape_cast %3 : vector<1x256x1xf32> to vector<256x1xf32>
    %5 = math.floor %4 : vector<256x1xf32>
    %cst = arith.constant 0.000000e+00 : f32
    %cst_3 = arith.constant 1.500000e+01 : f32
    %6 = vector.broadcast %cst : f32 to vector<256x1xf32>
    %7 = arith.maximumf %6, %5 : vector<256x1xf32>
    %8 = vector.broadcast %cst_3 : f32 to vector<256x1xf32>
    %9 = arith.minimumf %8, %7 : vector<256x1xf32>
    %cst_4 = arith.constant 1.000000e+00 : f32
    %10 = vector.broadcast %cst_4 : f32 to vector<256x1xf32>
    %11 = arith.addf %5, %10 : vector<256x1xf32>
    %cst_5 = arith.constant 0.000000e+00 : f32
    %cst_6 = arith.constant 1.500000e+01 : f32
    %12 = vector.broadcast %cst_5 : f32 to vector<256x1xf32>
    %13 = arith.maximumf %12, %11 : vector<256x1xf32>
    %14 = vector.broadcast %cst_6 : f32 to vector<256x1xf32>
    %15 = arith.minimumf %14, %13 : vector<256x1xf32>
    %16 = arith.cmpf oeq, %5, %9 : vector<256x1xf32>
    %17 = arith.subf %4, %9 : vector<256x1xf32>
    %18 = math.absf %17 : vector<256x1xf32>
    %cst_7 = arith.constant 1.000000e+00 : f32
    %19 = vector.broadcast %cst_7 : f32 to vector<256x1xf32>
    %20 = arith.subf %19, %18 : vector<256x1xf32>
    %cst_8 = arith.constant 0.000000e+00 : f32
    %21 = vector.broadcast %cst_8 : f32 to vector<256x1xf32>
    %22 = arith.select %16, %20, %21 : vector<256x1xi1>, vector<256x1xf32>
    %23 = arith.cmpf oeq, %11, %15 : vector<256x1xf32>
    %24 = arith.subf %4, %15 : vector<256x1xf32>
    %25 = math.absf %24 : vector<256x1xf32>
    %cst_9 = arith.constant 1.000000e+00 : f32
    %26 = vector.broadcast %cst_9 : f32 to vector<256x1xf32>
    %27 = arith.subf %26, %25 : vector<256x1xf32>
    %cst_10 = arith.constant 0.000000e+00 : f32
    %28 = vector.broadcast %cst_10 : f32 to vector<256x1xf32>
    %29 = arith.select %23, %27, %28 : vector<256x1xi1>, vector<256x1xf32>
    %30 = tpu.iota {dimensions = array<i32: 1>} : vector<1x16xi32>
    %31 = arith.sitofp %30 : vector<1x16xi32> to vector<1x16xf32>
    %32 = vector.broadcast %31 : vector<1x16xf32> to vector<256x16xf32>
    %33 = vector.broadcast %15 : vector<256x1xf32> to vector<256x16xf32>
    %34 = arith.cmpf oeq, %32, %33 : vector<256x16xf32>
    %cst_11 = arith.constant 0.000000e+00 : f32
    %35 = vector.shape_cast %29 : vector<256x1xf32> to vector<256x1xf32>
    %36 = vector.broadcast %35 : vector<256x1xf32> to vector<256x16xf32>
    %37 = vector.broadcast %cst_11 : f32 to vector<256x16xf32>
    %38 = arith.select %34, %36, %37 : vector<256x16xi1>, vector<256x16xf32>
    %39 = vector.broadcast %31 : vector<1x16xf32> to vector<256x16xf32>
    %40 = vector.broadcast %9 : vector<256x1xf32> to vector<256x16xf32>
    %41 = arith.cmpf oeq, %39, %40 : vector<256x16xf32>
    %cst_12 = arith.constant 0.000000e+00 : f32
    %42 = vector.shape_cast %22 : vector<256x1xf32> to vector<256x1xf32>
    %43 = vector.broadcast %42 : vector<256x1xf32> to vector<256x16xf32>
    %44 = vector.broadcast %cst_12 : f32 to vector<256x16xf32>
    %45 = arith.select %41, %43, %44 : vector<256x16xi1>, vector<256x16xf32>
    %46 = arith.addf %38, %45 : vector<256x16xf32>
    %c0_13 = arith.constant 0 : index
    %c0_14 = arith.constant 0 : index
    %c0_15 = arith.constant 0 : index
    %47 = vector.load %arg5[%c0_13, %c0_14, %c0_15] : memref<1x1x256xf32, #tpu.memory_space<vmem>>, vector<1x1x256xf32>
    %48 = vector.shape_cast %47 : vector<1x1x256xf32> to vector<1x256xf32>
    %49 = math.floor %48 : vector<1x256xf32>
    %cst_16 = arith.constant 0.000000e+00 : f32
    %cst_17 = arith.constant 1.500000e+01 : f32
    %50 = vector.broadcast %cst_16 : f32 to vector<1x256xf32>
    %51 = arith.maximumf %50, %49 : vector<1x256xf32>
    %52 = vector.broadcast %cst_17 : f32 to vector<1x256xf32>
    %53 = arith.minimumf %52, %51 : vector<1x256xf32>
    %cst_18 = arith.constant 1.000000e+00 : f32
    %54 = vector.broadcast %cst_18 : f32 to vector<1x256xf32>
    %55 = arith.addf %49, %54 : vector<1x256xf32>
    %cst_19 = arith.constant 0.000000e+00 : f32
    %cst_20 = arith.constant 1.500000e+01 : f32
    %56 = vector.broadcast %cst_19 : f32 to vector<1x256xf32>
    %57 = arith.maximumf %56, %55 : vector<1x256xf32>
    %58 = vector.broadcast %cst_20 : f32 to vector<1x256xf32>
    %59 = arith.minimumf %58, %57 : vector<1x256xf32>
    %60 = arith.cmpf oeq, %49, %53 : vector<1x256xf32>
    %61 = arith.subf %48, %53 : vector<1x256xf32>
    %62 = math.absf %61 : vector<1x256xf32>
    %cst_21 = arith.constant 1.000000e+00 : f32
    %63 = vector.broadcast %cst_21 : f32 to vector<1x256xf32>
    %64 = arith.subf %63, %62 : vector<1x256xf32>
    %cst_22 = arith.constant 0.000000e+00 : f32
    %65 = vector.broadcast %cst_22 : f32 to vector<1x256xf32>
    %66 = arith.select %60, %64, %65 : vector<1x256xi1>, vector<1x256xf32>
    %67 = arith.cmpf oeq, %55, %59 : vector<1x256xf32>
    %68 = arith.subf %48, %59 : vector<1x256xf32>
    %69 = math.absf %68 : vector<1x256xf32>
    %cst_23 = arith.constant 1.000000e+00 : f32
    %70 = vector.broadcast %cst_23 : f32 to vector<1x256xf32>
    %71 = arith.subf %70, %69 : vector<1x256xf32>
    %cst_24 = arith.constant 0.000000e+00 : f32
    %72 = vector.broadcast %cst_24 : f32 to vector<1x256xf32>
    %73 = arith.select %67, %71, %72 : vector<1x256xi1>, vector<1x256xf32>
    %c0_25 = arith.constant 0 : index
    %c0_26 = arith.constant 0 : index
    %74 = vector.load %arg8[%c0_25, %c0_26] : memref<16x16xf32, #tpu.memory_space<vmem>>, vector<16x16xf32>
    %75 = tpu.iota {dimensions = array<i32: 0>} : vector<16x1xi32>
    %76 = arith.sitofp %75 : vector<16x1xi32> to vector<16x1xf32>
    %cst_27 = arith.constant 0.000000e+00 : f32
    %77 = vector.broadcast %cst_27 : f32 to vector<16x1xf32>
    %78 = arith.addf %76, %77 : vector<16x1xf32>
    %79 = vector.broadcast %78 : vector<16x1xf32> to vector<16x256xf32>
    %80 = vector.broadcast %59 : vector<1x256xf32> to vector<16x256xf32>
    %81 = arith.cmpf oeq, %79, %80 : vector<16x256xf32>
    %cst_28 = arith.constant 0.000000e+00 : f32
    %82 = vector.shape_cast %73 : vector<1x256xf32> to vector<1x256xf32>
    %83 = vector.broadcast %82 : vector<1x256xf32> to vector<16x256xf32>
    %84 = vector.broadcast %cst_28 : f32 to vector<16x256xf32>
    %85 = arith.select %81, %83, %84 : vector<16x256xi1>, vector<16x256xf32>
    %86 = vector.broadcast %78 : vector<16x1xf32> to vector<16x256xf32>
    %87 = vector.broadcast %53 : vector<1x256xf32> to vector<16x256xf32>
    %88 = arith.cmpf oeq, %86, %87 : vector<16x256xf32>
    %cst_29 = arith.constant 0.000000e+00 : f32
    %89 = vector.shape_cast %66 : vector<1x256xf32> to vector<1x256xf32>
    %90 = vector.broadcast %89 : vector<1x256xf32> to vector<16x256xf32>
    %91 = vector.broadcast %cst_29 : f32 to vector<16x256xf32>
    %92 = arith.select %88, %90, %91 : vector<16x256xi1>, vector<16x256xf32>
    %93 = arith.addf %85, %92 : vector<16x256xf32>
    %cst_30 = arith.constant dense<0.000000e+00> : vector<16x16xf32>
    %94 = tpu.matmul %93, %46, %cst_30 {dimension_numbers = #tpu.dot_dimension_numbers<[1], [0], [0], [1], [0, 0, 1, 1], [], []>, precision = #tpu.contract_precision<fp32>} : vector<16x256xf32>, vector<256x16xf32>, vector<16x16xf32> -> vector<16x16xf32>
    %95 = arith.addf %74, %94 : vector<16x16xf32>
    %c0_31 = arith.constant 0 : index
    %c0_32 = arith.constant 0 : index
    %96 = vector.load %arg8[%c0_31, %c0_32] : memref<16x16xf32, #tpu.memory_space<vmem>>, vector<16x16xf32>
    tpu.vector_store %arg8[%c0_31, %c0_32], %95 {strides = array<i32>} : memref<16x16xf32, #tpu.memory_space<vmem>>, vector<16x16xf32>,
    %c0_i32_33 = arith.constant 0 : i32
    %97 = arith.cmpi eq, %arg1, %c0_i32_33 : i32
    %98 = arith.extui %97 : i1 to i32
    %c0_i32_34 = arith.constant 0 : i32
    %99 = arith.cmpi ne, %98, %c0_i32_34 : i32
    scf.if %99 {
      %c0_35 = arith.constant 0 : index
      %c0_36 = arith.constant 0 : index
      %100 = vector.load %arg8[%c0_35, %c0_36] : memref<16x16xf32, #tpu.memory_space<vmem>>, vector<16x16xf32>
      %c0_37 = arith.constant 0 : index
      %c0_38 = arith.constant 0 : index
      %c0_39 = arith.constant 0 : index
      %101 = vector.load %arg6[%c0_37, %c0_38, %c0_39] : memref<1x16x16xf32, #tpu.memory_space<vmem>>, vector<1x16x16xf32>
      %102 = vector.shape_cast %101 : vector<1x16x16xf32> to vector<16x16xf32>
      %103 = vector.shape_cast %100 : vector<16x16xf32> to vector<1x16x16xf32>
      tpu.vector_store %arg6[%c0_37, %c0_38, %c0_39], %103 {strides = array<i32>} : memref<1x16x16xf32, #tpu.memory_space<vmem>>, vector<1x16x16xf32>,
      %cst_40 = arith.constant 0.949999988 : f32
      %104 = vector.broadcast %cst_40 : f32 to vector<16x16xf32>
      %105 = arith.cmpf ogt, %100, %104 : vector<16x16xf32>
      %106 = arith.extui %105 : vector<16x16xi1> to vector<16x16xi32>
      %107 = arith.sitofp %106 : vector<16x16xi32> to vector<16x16xf32>
      %c0_41 = arith.constant 0 : index
      %c0_42 = arith.constant 0 : index
      %c0_43 = arith.constant 0 : index
      %108 = vector.load %arg7[%c0_41, %c0_42, %c0_43] : memref<1x16x16xf32, #tpu.memory_space<vmem>>, vector<1x16x16xf32>
      %109 = vector.shape_cast %108 : vector<1x16x16xf32> to vector<16x16xf32>
      %110 = vector.shape_cast %107 : vector<16x16xf32> to vector<1x16x16xf32>
      tpu.vector_store %arg7[%c0_41, %c0_42, %c0_43], %110 {strides = array<i32>} : memref<1x16x16xf32, #tpu.memory_space<vmem>>, vector<1x16x16xf32>,
    } else {
    }
    return
  }
  func.func @transform_0(%arg0: i32, %arg1: i32, %arg2: memref<2x1xi32, #tpu.memory_space<smem>>, %arg3: memref<2x1xi32, #tpu.memory_space<smem>>) -> (i32, i32, i32) {
    %c0_i32 = arith.constant 0 : i32
    %c0_i32_0 = arith.constant 0 : i32
    return %arg0, %arg1, %c0_i32 : i32, i32, i32
  }
  func.func @transform_1(%arg0: i32, %arg1: i32, %arg2: memref<2x1xi32, #tpu.memory_space<smem>>, %arg3: memref<2x1xi32, #tpu.memory_space<smem>>) -> (i32, i32, i32) {
    %c0_i32 = arith.constant 0 : i32
    %c0_i32_0 = arith.constant 0 : i32
    return %arg0, %c0_i32, %arg1 : i32, i32, i32
  }
  func.func @transform_2(%arg0: i32, %arg1: i32, %arg2: memref<2x1xi32, #tpu.memory_space<smem>>, %arg3: memref<2x1xi32, #tpu.memory_space<smem>>) -> (i32, i32, i32) {
    %c0_i32 = arith.constant 0 : i32
    %c0_i32_0 = arith.constant 0 : i32
    %c0_i32_1 = arith.constant 0 : i32
    return %arg0, %c0_i32, %c0_i32_0 : i32, i32, i32
  }
  func.func @transform_3(%arg0: i32, %arg1: i32, %arg2: memref<2x1xi32, #tpu.memory_space<smem>>, %arg3: memref<2x1xi32, #tpu.memory_space<smem>>) -> (i32, i32, i32) {
    %c0_i32 = arith.constant 0 : i32
    %c0_i32_0 = arith.constant 0 : i32
    %c0_i32_1 = arith.constant 0 : i32
    return %arg0, %c0_i32, %c0_i32_0 : i32, i32, i32
  }
}

</mosaic_0001>

<llo_original>
// kernel: tpu_custom_call.1
$region0: #{tpu_custom_call.1}
  #allocation0 [shape = 'u32[]', space=smem, size = 0x4, offset = 0x4, fixed_abs, tag = 'smem constant byte address 0x4 - core index']
  #allocation1 [shape = 'u32[144,128]{1,0:T(1,128)}', space=vmem, size = 0x12000, scoped, tag = 'internal scratch']
  #allocation2 [shape = 'f32[16,16]{1,0:T(8,128)}', space=vmem, size = 0x2000, scoped, tag = 'scratch operand']
  #allocation3 [shape = 's32[1]{0}', space=sflag, size = 0x4, scoped, tag = 'scoped memory for tpu_custom_call.1']
  #allocation4 [shape = 'u8[1024]{0}', space=smem, size = 0x400, scoped, tag = 'prefetched SMEM operand 0']
  #allocation5 [shape = 'u8[1024]{0}', space=smem, size = 0x400, scoped, tag = 'prefetched SMEM operand 1']
  %s0 = inlined_call_operand.hbm [shape: s32[2,1], index: 0, kind: input, shape index: {}]
  %s1 = inlined_call_operand.hbm [shape: s32[2,1], index: 1, kind: input, shape index: {}]
  %s2 = inlined_call_operand.hbm [shape: f32[2,256,1], index: 2, kind: input, shape index: {}]
  %s3 = inlined_call_operand.hbm [shape: f32[2,1,256], index: 3, kind: input, shape index: {}]
  %s4 = inlined_call_operand.hbm [shape: f32[2,16,16], index: 4, kind: output, shape index: {0}]
  %s5 = inlined_call_operand.hbm [shape: f32[2,16,16], index: 5, kind: output, shape index: {1}]
  %6 = xla_tuple %s4, %s5
  %s7 = sld [smem:[#allocation0]]
  $region65: #{tpu_custom_call.1} parent=0
    _
  %s9 = ssub.s32 1, %s7
  %s10 = scalar_select 0, %s9, %s7
  %12 = dma.hbm_to_smem %s0, 32, [#allocation4], [#allocation3]
  %14 = dma.hbm_to_smem %s1, 32, [#allocation5], [#allocation3]
  %15 = dma.done [#allocation3], 64
  %16 = sfence
  $region1: #{tpu_custom_call.1} parent=0
    #allocation6 [shape = 'u8[262144]{0}', space=vmem, size = 0x40000, scoped, tag = 'input window, operand 2']
    #allocation7 [shape = 's32[2]{0}', space=sflag, size = 0x8, scoped, tag = 'scoped memory for tpu_custom_call.1']
    #allocation8 [shape = 's32[2]{0}', space=sflag, size = 0x8, scoped, tag = 'scoped memory for tpu_custom_call.1']
    #allocation9 [shape = 'u8[2048]{0}', space=vmem, size = 0x800, scoped, tag = 'input window, operand 3']
    #allocation10 [shape = 's32[2]{0}', space=sflag, size = 0x8, scoped, tag = 'scoped memory for tpu_custom_call.1']
    #allocation11 [shape = 'u8[16384]{0}', space=vmem, size = 0x4000, scoped, tag = 'output window, operand 0']
    #allocation12 [shape = 'u8[16384]{0}', space=vmem, size = 0x4000, scoped, tag = 'output window, operand 1']
    #allocation13 [shape = 's32[2]{0}', space=sflag, size = 0x8, scoped, tag = 'scoped memory for tpu_custom_call.1']
    %17 = vsyncpa [#allocation7], 0
    %s18 = scalar_lea.sflag [#allocation7], 1
    %19 = vsyncpa %s18, 0
    %20 = vsyncpa [#allocation10], 0
    %s21 = scalar_lea.sflag [#allocation10], 1
    %22 = vsyncpa %s21, 0
    %23 = vsyncpa [#allocation8], 0
    %s24 = scalar_lea.sflag [#allocation8], 1
    %25 = vsyncpa %s24, 0
    %26 = vsyncpa [#allocation13], 0
    %s27 = scalar_lea.sflag [#allocation13], 1
    %28 = vsyncpa %s27, 0
    loop: start=0, step=1, limit=4
    $region2: #{tpu_custom_call.1} parent=1 // loop_pre_header
      _
    $region3: #{tpu_custom_call.1} parent=1 // loop_header
      %s30 = sphi 0, %s34
      %p31 = scmp.ge.s32.totalorder %s30, 4
      %s37 = sphi 0, %s49
      %s38 = sphi 0, %s45
      %s39 = sphi 0, %s37
      %s40 = sphi 0, %s38
      %s41 = sphi 0, %s39
      %s42 = sphi 0, %s40
      %s54 = sphi 0, %s56
      %s57 = sphi 0, %s54
      %s58 = sphi 0, %s57
      %s74 = sphi 0, %s58
      %s82 = sphi 0, %s84
      %s85 = sphi 0, %s82
      %s86 = sphi 0, %s85
      %s102 = sphi 0, %s86
      %s108 = sphi 0, %s110
      %s111 = sphi 0, %s108
      %s112 = sphi 0, %s111
      %s128 = sphi 0, %s112
      %s134 = sphi 0, %s136
      %s137 = sphi 0, %s134
      %s138 = sphi 0, %s137
      %s154 = sphi 0, %s138
    $region4: #{tpu_custom_call.1} parent=1 // loop_header_branch
      %33 = sbr.rel (%p31) target = $region8
    $region5: #{tpu_custom_call.1} parent=1 // loop_body
      %s35 = ssub.s32 %s30, 1
      %s36 = ssub.s32 %s30, 2
      %s43 = sadd.s32 1, %s38
      %p44 = scmp.ge.s32.totalorder %s43, 1
      %s45 = scalar_select %p44, 0, %s43
      %s46 = sadd.s32 1, %s37
      %s47 = scalar_select %p44, %s46, %s37
      %p48 = scmp.ge.s32.totalorder %s47, 2
      %s49 = scalar_select %p48, 0, %s47
      %s50 = ssub.s32 %s37, %s49
      %s51 = ssub.s32 %s38, %s45
      %s52 = sor.u32 %s50, %s51
      %p53 = scmp.eq.s32.totalorder %s52, 0
      %s55 = sadd.s32 %s54, 1
      %s56 = scalar_select %p53, %s54, %s55
      %p59 = pneg %p53
      %p60 = scmp.eq.s32.totalorder %s30, 1
      %p61 = por %p59, %p60
      %p62 = scmp.ne.s32.totalorder %s54, %s57
      %p63 = scmp.eq.s32.totalorder %s30, 0
      %p64 = por %p62, %p63
      %p65 = scmp.ne.s32.totalorder %s54, %s57
      %p66 = scmp.eq.s32.totalorder %s35, 1
      %p67 = por %p65, %p66
      %p68 = scmp.ne.s32.totalorder %s57, %s58
      %p69 = scmp.eq.s32.totalorder %s35, 0
      %p70 = por %p68, %p69
      %p71 = scmp.ne.s32.totalorder %s57, %s58
      %p72 = scmp.eq.s32.totalorder %s36, 1
      %p73 = por %p71, %p72
      %p75 = scmp.ne.s32.totalorder %s58, %s74
      %p76 = scmp.eq.s32.totalorder %s36, 0
      %p77 = por %p75, %p76
      %s78 = ssub.s32 %s37, %s49
      %s79 = ssub.s32 %s38, %s45
      %s80 = sor.u32 %s78, %s79
      %p81 = scmp.eq.s32.totalorder %s80, 0
      %s83 = sadd.s32 %s82, 1
      %s84 = scalar_select %p81, %s82, %s83
      %p87 = pneg %p81
      %p88 = scmp.eq.s32.totalorder %s30, 1
      %p89 = por %p87, %p88
      %p90 = scmp.ne.s32.totalorder %s82, %s85
      %p91 = scmp.eq.s32.totalorder %s30, 0
      %p92 = por %p90, %p91
      %p93 = scmp.ne.s32.totalorder %s82, %s85
      %p94 = scmp.eq.s32.totalorder %s35, 1
      %p95 = por %p93, %p94
      %p96 = scmp.ne.s32.totalorder %s85, %s86
      %p97 = scmp.eq.s32.totalorder %s35, 0
      %p98 = por %p96, %p97
      %p99 = scmp.ne.s32.totalorder %s85, %s86
      %p100 = scmp.eq.s32.totalorder %s36, 1
      %p101 = por %p99, %p100
      %p103 = scmp.ne.s32.totalorder %s86, %s102
      %p104 = scmp.eq.s32.totalorder %s36, 0
      %p105 = por %p103, %p104
      %s106 = ssub.s32 %s37, %s49
      %p107 = scmp.eq.s32.totalorder %s106, 0
      %s109 = sadd.s32 %s108, 1
      %s110 = scalar_select %p107, %s108, %s109
      %p113 = pneg %p107
      %p114 = scmp.eq.s32.totalorder %s30, 1
      %p115 = por %p113, %p114
      %p116 = scmp.ne.s32.totalorder %s108, %s111
      %p117 = scmp.eq.s32.totalorder %s30, 0
      %p118 = por %p116, %p117
      %p119 = scmp.ne.s32.totalorder %s108, %s111
      %p120 = scmp.eq.s32.totalorder %s35, 1
      %p121 = por %p119, %p120
      %p122 = scmp.ne.s32.totalorder %s111, %s112
      %p123 = scmp.eq.s32.totalorder %s35, 0
      %p124 = por %p122, %p123
      %p125 = scmp.ne.s32.totalorder %s111, %s112
      %p126 = scmp.eq.s32.totalorder %s36, 1
      %p127 = por %p125, %p126
      %p129 = scmp.ne.s32.totalorder %s112, %s128
      %p130 = scmp.eq.s32.totalorder %s36, 0
      %p131 = por %p129, %p130
      %s132 = ssub.s32 %s37, %s49
      %p133 = scmp.eq.s32.totalorder %s132, 0
      %s135 = sadd.s32 %s134, 1
      %s136 = scalar_select %p133, %s134, %s135
      %p139 = pneg %p133
      %p140 = scmp.eq.s32.totalorder %s30, 1
      %p141 = por %p139, %p140
      %p142 = scmp.ne.s32.totalorder %s134, %s137
      %p143 = scmp.eq.s32.totalorder %s30, 0
      %p144 = por %p142, %p143
      %p145 = scmp.ne.s32.totalorder %s134, %s137
      %p146 = scmp.eq.s32.totalorder %s35, 1
      %p147 = por %p145, %p146
      %p148 = scmp.ne.s32.totalorder %s137, %s138
      %p149 = scmp.eq.s32.totalorder %s35, 0
      %p150 = por %p148, %p149
      %p151 = scmp.ne.s32.totalorder %s137, %s138
      %p152 = scmp.eq.s32.totalorder %s36, 1
      %p153 = por %p151, %p152
      %p155 = scmp.ne.s32.totalorder %s138, %s154
      %p156 = scmp.eq.s32.totalorder %s36, 0
      %p157 = por %p155, %p156
      %p158 = scmp.le.s32.totalorder 1, %s30
      %p159 = scmp.lt.s32.totalorder %s30, 3
      %p160 = pnand %p158, %p159
      %p161 = pneg %p160
      // Predicated region
      $region9: #{tpu_custom_call.1} parent=5 // pred_check
        _
      $region10: #{tpu_custom_call.1} parent=5 // pred_check_branch
        %163 = sbr.rel (%p160) target = $region12
      $region11: #{tpu_custom_call.1} parent=5 // pred_region
        %s164 = ssub.s32 %s30, 1
      $region12: #{tpu_custom_call.1} parent=5 // pred_fallthru
        _
      %p165 = scmp.lt.s32.totalorder %s30, 2
      // Predicated region
      $region13: #{tpu_custom_call.1} parent=5 // pred_check
        %p166 = pneg %p165
      $region14: #{tpu_custom_call.1} parent=5 // pred_check_branch
        %168 = sbr.rel (%p166) target = $region16
      $region15: #{tpu_custom_call.1} parent=5 // pred_region
        // Predicated region
        $region17: #{tpu_custom_call.1} parent=15 // pred_check
          %p169 = pneg %p64
        $region18: #{tpu_custom_call.1} parent=15 // pred_check_branch
          %171 = sbr.rel (%p169) target = $region20
        $region19: #{tpu_custom_call.1} parent=15 // pred_region
          %s172 = sand.u32 %s54, 1
          %s173 = scalar_lea.sflag [#allocation7], %s172
          %s174 = sand.u32 %s54, 1
          %s175 = smul.addr %s174, 256
          %s176 = scalar_lea.vmem [#allocation6], %s175
          %s177 = smul.u32 32, %s38
          %s179 = ssub.s32 4096, 4096
          %180 = vsyncadd %s173, %s179
          %s181 = smul.addr %s37, 32
          %s182 = sadd.s32 %s177, %s181
          %s183 = smul.addr %s182, 128
          %s184 = scalar_lea.hbm %s2, %s183
          %s185 = sshll.u32 %s176, 4
          %s186 = int_to_ptr.vmem [resolvable:$true] %s185
          %191 = dma.hbm_to_vmem [thread:$0]  %s184, 4096, %s186, %s173, 128, 128, 8
        $region20: #{tpu_custom_call.1} parent=15 // pred_fallthru
          _
        // Predicated region
        $region21: #{tpu_custom_call.1} parent=15 // pred_check
          %p192 = pneg %p92
        $region22: #{tpu_custom_call.1} parent=15 // pred_check_branch
          %194 = sbr.rel (%p192) target = $region24
        $region23: #{tpu_custom_call.1} parent=15 // pred_region
          %s195 = sand.u32 %s82, 1
          %s196 = scalar_lea.sflag [#allocation10], %s195
          %s197 = sand.u32 %s82, 1
          %s198 = smul.addr %s197, 2
          %s199 = scalar_lea.vmem [#allocation9], %s198
          %s200 = smul.u32 2, %s38
          %s202 = ssub.s32 32, 32
          %203 = vsyncadd %s196, %s202
          %s204 = smul.addr %s37, 2
          %s205 = sadd.s32 %s200, %s204
          %s206 = smul.addr %s205, 16
          %s207 = scalar_lea.hbm %s3, %s206
          %s209 = sshll.u32 %s199, 4
          %s210 = int_to_ptr.vmem [resolvable:$true] %s209
          %212 = dma.hbm_to_vmem [thread:$0]  %s207, 32, %s210, %s196
        $region24: #{tpu_custom_call.1} parent=15 // pred_fallthru
          _
      $region16: #{tpu_custom_call.1} parent=5 // pred_fallthru
        _
      %p213 = scmp.le.s32.totalorder 1, %s30
      %p214 = scmp.lt.s32.totalorder %s30, 3
      %p215 = pnand %p213, %p214
      %p216 = pneg %p215
      // Predicated region
      $region25: #{tpu_custom_call.1} parent=5 // pred_check
        _
      $region26: #{tpu_custom_call.1} parent=5 // pred_check_branch
        %218 = sbr.rel (%p215) target = $region28
      $region27: #{tpu_custom_call.1} parent=5 // pred_region
        %s219 = ssub.s32 %s30, 1
        %s220 = sand.u32 %s57, 1
        %s221 = scalar_lea.sflag [#allocation7], %s220
        %s222 = sand.u32 %s57, 1
        %s223 = smul.addr %s222, 256
        %s224 = scalar_lea.vmem [#allocation6], %s223
        // Predicated region
        $region29: #{tpu_custom_call.1} parent=27 // pred_check
          %p225 = pneg %p70
        $region30: #{tpu_custom_call.1} parent=27 // pred_check_branch
          %227 = sbr.rel (%p225) target = $region32
        $region31: #{tpu_custom_call.1} parent=27 // pred_region
          %228 = dma.done %s221, 4096
        $region32: #{tpu_custom_call.1} parent=27 // pred_fallthru
          _
        %s229 = sand.u32 %s85, 1
        %s230 = scalar_lea.sflag [#allocation10], %s229
        %s231 = sand.u32 %s85, 1
        %s232 = smul.addr %s231, 2
        %s233 = scalar_lea.vmem [#allocation9], %s232
        // Predicated region
        $region33: #{tpu_custom_call.1} parent=27 // pred_check
          %p234 = pneg %p98
        $region34: #{tpu_custom_call.1} parent=27 // pred_check_branch
          %236 = sbr.rel (%p234) target = $region36
        $region35: #{tpu_custom_call.1} parent=27 // pred_region
          %237 = dma.done %s230, 32
        $region36: #{tpu_custom_call.1} parent=27 // pred_fallthru
          _
        %s238 = sand.u32 %s57, 1
        %s239 = scalar_lea.sflag [#allocation7], %s238
        %s240 = sand.u32 %s57, 1
        %s241 = smul.addr %s240, 256
        %s242 = scalar_lea.vmem [#allocation6], %s241
        %p243 = pneg %p70
        %p244 = pneg %p67
        %s245 = sand.u32 %s85, 1
        %s246 = scalar_lea.sflag [#allocation10], %s245
        %s247 = sand.u32 %s85, 1
        %s248 = smul.addr %s247, 2
        %s249 = scalar_lea.vmem [#allocation9], %s248
        %p250 = pneg %p98
        %p251 = pneg %p95
        %p252 = pneg %p124
        %p253 = pneg %p121
        %s254 = sand.u32 %s111, 1
        %s255 = scalar_lea.sflag [#allocation8], %s254
        %s256 = sand.u32 %s111, 1
        %s257 = smul.addr %s256, 16
        %s258 = scalar_lea.vmem [#allocation11], %s257
        %p259 = pneg %p150
        %p260 = pneg %p147
        %s261 = sand.u32 %s137, 1
        %s262 = scalar_lea.sflag [#allocation13], %s261
        %s263 = sand.u32 %s137, 1
        %s264 = smul.addr %s263, 16
        %s265 = scalar_lea.vmem [#allocation12], %s264
        %s266 = smul.u32 32, %s40
        %s267 = smul.u32 2, %s40
        %p268 = scmp.eq.s32.totalorder %s40, 0
        // Predicated region
        $region37: #{tpu_custom_call.1} parent=27 // pred_check
          %p269 = pneg %p268
        $region38: #{tpu_custom_call.1} parent=27 // pred_check_branch
          %271 = sbr.rel (%p269) target = $region40
        $region39: #{tpu_custom_call.1} parent=27 // pred_region
          %vm272 = vcmask 130048
          %273 = vst.msk [vmem:[#allocation2] sm:$0xff] %vm272, 0.0
          %274 = vst.msk [vmem:[#allocation2 + $0x8] sm:$0xff] %vm272, 0.0
        $region40: #{tpu_custom_call.1} parent=27 // pred_fallthru
          _
        %v275 = vld [vmem:[%s224] sm:$0xff]
        %v276 = vld [vmem:[%s224 + $0x8] sm:$0xff]
        %v277 = vld [vmem:[%s224 + $0x10] sm:$0xff]
        %v278 = vld [vmem:[%s224 + $0x18] sm:$0xff]
        %v279 = vld [vmem:[%s224 + $0x20] sm:$0xff]
        %v280 = vld [vmem:[%s224 + $0x28] sm:$0xff]
        %v281 = vld [vmem:[%s224 + $0x30] sm:$0xff]
        %v282 = vld [vmem:[%s224 + $0x38] sm:$0xff]
        %v283 = vld [vmem:[%s224 + $0x40] sm:$0xff]
        %v284 = vld [vmem:[%s224 + $0x48] sm:$0xff]
        %v285 = vld [vmem:[%s224 + $0x50] sm:$0xff]
        %v286 = vld [vmem:[%s224 + $0x58] sm:$0xff]
        %v287 = vld [vmem:[%s224 + $0x60] sm:$0xff]
        %v288 = vld [vmem:[%s224 + $0x68] sm:$0xff]
        %v289 = vld [vmem:[%s224 + $0x70] sm:$0xff]
        %v290 = vld [vmem:[%s224 + $0x78] sm:$0xff]
        %v291 = vld [vmem:[%s224 + $0x80] sm:$0xff]
        %v292 = vld [vmem:[%s224 + $0x88] sm:$0xff]
        %v293 = vld [vmem:[%s224 + $0x90] sm:$0xff]
        %v294 = vld [vmem:[%s224 + $0x98] sm:$0xff]
        %v295 = vld [vmem:[%s224 + $0xa0] sm:$0xff]
        %v296 = vld [vmem:[%s224 + $0xa8] sm:$0xff]
        %v297 = vld [vmem:[%s224 + $0xb0] sm:$0xff]
        %v298 = vld [vmem:[%s224 + $0xb8] sm:$0xff]
        %v299 = vld [vmem:[%s224 + $0xc0] sm:$0xff]
        %v300 = vld [vmem:[%s224 + $0xc8] sm:$0xff]
        %v301 = vld [vmem:[%s224 + $0xd0] sm:$0xff]
        %v302 = vld [vmem:[%s224 + $0xd8] sm:$0xff]
        %v303 = vld [vmem:[%s224 + $0xe0] sm:$0xff]
        %v304 = vld [vmem:[%s224 + $0xe8] sm:$0xff]
        %v305 = vld [vmem:[%s224 + $0xf0] sm:$0xff]
        %v306 = vld [vmem:[%s224 + $0xf8] sm:$0xff]
        %v307 = vfloor.f32 %v275
        %v308 = vfloor.f32 %v276
        %v309 = vfloor.f32 %v277
        %v310 = vfloor.f32 %v278
        %v311 = vfloor.f32 %v279
        %v312 = vfloor.f32 %v280
        %v313 = vfloor.f32 %v281
        %v314 = vfloor.f32 %v282
        %v315 = vfloor.f32 %v283
        %v316 = vfloor.f32 %v284
        %v317 = vfloor.f32 %v285
        %v318 = vfloor.f32 %v286
        %v319 = vfloor.f32 %v287
        %v320 = vfloor.f32 %v288
        %v321 = vfloor.f32 %v289
        %v322 = vfloor.f32 %v290
        %v323 = vfloor.f32 %v291
        %v324 = vfloor.f32 %v292
        %v325 = vfloor.f32 %v293
        %v326 = vfloor.f32 %v294
        %v327 = vfloor.f32 %v295
        %v328 = vfloor.f32 %v296
        %v329 = vfloor.f32 %v297
        %v330 = vfloor.f32 %v298
        %v331 = vfloor.f32 %v299
        %v332 = vfloor.f32 %v300
        %v333 = vfloor.f32 %v301
        %v334 = vfloor.f32 %v302
        %v335 = vfloor.f32 %v303
        %v336 = vfloor.f32 %v304
        %v337 = vfloor.f32 %v305
        %v338 = vfloor.f32 %v306
        %v339 = vmax.f32 %v307, 0.0
        %v340 = vmax.f32 %v308, 0.0
        %v341 = vmax.f32 %v309, 0.0
        %v342 = vmax.f32 %v310, 0.0
        %v343 = vmax.f32 %v311, 0.0
        %v344 = vmax.f32 %v312, 0.0
        %v345 = vmax.f32 %v313, 0.0
        %v346 = vmax.f32 %v314, 0.0
        %v347 = vmax.f32 %v315, 0.0
        %v348 = vmax.f32 %v316, 0.0
        %v349 = vmax.f32 %v317, 0.0
        %v350 = vmax.f32 %v318, 0.0
        %v351 = vmax.f32 %v319, 0.0
        %v352 = vmax.f32 %v320, 0.0
        %v353 = vmax.f32 %v321, 0.0
        %v354 = vmax.f32 %v322, 0.0
        %v355 = vmax.f32 %v323, 0.0
        %v356 = vmax.f32 %v324, 0.0
        %v357 = vmax.f32 %v325, 0.0
        %v358 = vmax.f32 %v326, 0.0
        %v359 = vmax.f32 %v327, 0.0
        %v360 = vmax.f32 %v328, 0.0
        %v361 = vmax.f32 %v329, 0.0
        %v362 = vmax.f32 %v330, 0.0
        %v363 = vmax.f32 %v331, 0.0
        %v364 = vmax.f32 %v332, 0.0
        %v365 = vmax.f32 %v333, 0.0
        %v366 = vmax.f32 %v334, 0.0
        %v367 = vmax.f32 %v335, 0.0
        %v368 = vmax.f32 %v336, 0.0
        %v369 = vmax.f32 %v337, 0.0
        %v370 = vmax.f32 %v338, 0.0
        %v371 = vmin.f32 %v339, 15.0
        %v372 = vmin.f32 %v340, 15.0
        %v373 = vmin.f32 %v341, 15.0
        %v374 = vmin.f32 %v342, 15.0
        %v375 = vmin.f32 %v343, 15.0
        %v376 = vmin.f32 %v344, 15.0
        %v377 = vmin.f32 %v345, 15.0
        %v378 = vmin.f32 %v346, 15.0
        %v379 = vmin.f32 %v347, 15.0
        %v380 = vmin.f32 %v348, 15.0
        %v381 = vmin.f32 %v349, 15.0
        %v382 = vmin.f32 %v350, 15.0
        %v383 = vmin.f32 %v351, 15.0
        %v384 = vmin.f32 %v352, 15.0
        %v385 = vmin.f32 %v353, 15.0
        %v386 = vmin.f32 %v354, 15.0
        %v387 = vmin.f32 %v355, 15.0
        %v388 = vmin.f32 %v356, 15.0
        %v389 = vmin.f32 %v357, 15.0
        %v390 = vmin.f32 %v358, 15.0
        %v391 = vmin.f32 %v359, 15.0
        %v392 = vmin.f32 %v360, 15.0
        %v393 = vmin.f32 %v361, 15.0
        %v394 = vmin.f32 %v362, 15.0
        %v395 = vmin.f32 %v363, 15.0
        %v396 = vmin.f32 %v364, 15.0
        %v397 = vmin.f32 %v365, 15.0
        %v398 = vmin.f32 %v366, 15.0
        %v399 = vmin.f32 %v367, 15.0
        %v400 = vmin.f32 %v368, 15.0
        %v401 = vmin.f32 %v369, 15.0
        %v402 = vmin.f32 %v370, 15.0
        %v403 = vadd.f32 %v307, 1.0
        %v404 = vadd.f32 %v308, 1.0
        %v405 = vadd.f32 %v309, 1.0
        %v406 = vadd.f32 %v310, 1.0
        %v407 = vadd.f32 %v311, 1.0
        %v408 = vadd.f32 %v312, 1.0
        %v409 = vadd.f32 %v313, 1.0
        %v410 = vadd.f32 %v314, 1.0
        %v411 = vadd.f32 %v315, 1.0
        %v412 = vadd.f32 %v316, 1.0
        %v413 = vadd.f32 %v317, 1.0
        %v414 = vadd.f32 %v318, 1.0
        %v415 = vadd.f32 %v319, 1.0
        %v416 = vadd.f32 %v320, 1.0
        %v417 = vadd.f32 %v321, 1.0
        %v418 = vadd.f32 %v322, 1.0
        %v419 = vadd.f32 %v323, 1.0
        %v420 = vadd.f32 %v324, 1.0
        %v421 = vadd.f32 %v325, 1.0
        %v422 = vadd.f32 %v326, 1.0
        %v423 = vadd.f32 %v327, 1.0
        %v424 = vadd.f32 %v328, 1.0
        %v425 = vadd.f32 %v329, 1.0
        %v426 = vadd.f32 %v330, 1.0
        %v427 = vadd.f32 %v331, 1.0
        %v428 = vadd.f32 %v332, 1.0
        %v429 = vadd.f32 %v333, 1.0
        %v430 = vadd.f32 %v334, 1.0
        %v431 = vadd.f32 %v335, 1.0
        %v432 = vadd.f32 %v336, 1.0
        %v433 = vadd.f32 %v337, 1.0
        %v434 = vadd.f32 %v338, 1.0
        %v435 = vmax.f32 %v403, 0.0
        %v436 = vmax.f32 %v404, 0.0
        %v437 = vmax.f32 %v405, 0.0
        %v438 = vmax.f32 %v406, 0.0
        %v439 = vmax.f32 %v407, 0.0
        %v440 = vmax.f32 %v408, 0.0
        %v441 = vmax.f32 %v409, 0.0
        %v442 = vmax.f32 %v410, 0.0
        %v443 = vmax.f32 %v411, 0.0
        %v444 = vmax.f32 %v412, 0.0
        %v445 = vmax.f32 %v413, 0.0
        %v446 = vmax.f32 %v414, 0.0
        %v447 = vmax.f32 %v415, 0.0
        %v448 = vmax.f32 %v416, 0.0
        %v449 = vmax.f32 %v417, 0.0
        %v450 = vmax.f32 %v418, 0.0
        %v451 = vmax.f32 %v419, 0.0
        %v452 = vmax.f32 %v420, 0.0
        %v453 = vmax.f32 %v421, 0.0
        %v454 = vmax.f32 %v422, 0.0
        %v455 = vmax.f32 %v423, 0.0
        %v456 = vmax.f32 %v424, 0.0
        %v457 = vmax.f32 %v425, 0.0
        %v458 = vmax.f32 %v426, 0.0
        %v459 = vmax.f32 %v427, 0.0
        %v460 = vmax.f32 %v428, 0.0
        %v461 = vmax.f32 %v429, 0.0
        %v462 = vmax.f32 %v430, 0.0
        %v463 = vmax.f32 %v431, 0.0
        %v464 = vmax.f32 %v432, 0.0
        %v465 = vmax.f32 %v433, 0.0
        %v466 = vmax.f32 %v434, 0.0
        %v467 = vmin.f32 %v435, 15.0
        %v468 = vmin.f32 %v436, 15.0
        %v469 = vmin.f32 %v437, 15.0
        %v470 = vmin.f32 %v438, 15.0
        %v471 = vmin.f32 %v439, 15.0
        %v472 = vmin.f32 %v440, 15.0
        %v473 = vmin.f32 %v441, 15.0
        %v474 = vmin.f32 %v442, 15.0
        %v475 = vmin.f32 %v443, 15.0
        %v476 = vmin.f32 %v444, 15.0
        %v477 = vmin.f32 %v445, 15.0
        %v478 = vmin.f32 %v446, 15.0
        %v479 = vmin.f32 %v447, 15.0
        %v480 = vmin.f32 %v448, 15.0
        %v481 = vmin.f32 %v449, 15.0
        %v482 = vmin.f32 %v450, 15.0
        %v483 = vmin.f32 %v451, 15.0
        %v484 = vmin.f32 %v452, 15.0
        %v485 = vmin.f32 %v453, 15.0
        %v486 = vmin.f32 %v454, 15.0
        %v487 = vmin.f32 %v455, 15.0
        %v488 = vmin.f32 %v456, 15.0
        %v489 = vmin.f32 %v457, 15.0
        %v490 = vmin.f32 %v458, 15.0
        %v491 = vmin.f32 %v459, 15.0
        %v492 = vmin.f32 %v460, 15.0
        %v493 = vmin.f32 %v461, 15.0
        %v494 = vmin.f32 %v462, 15.0
        %v495 = vmin.f32 %v463, 15.0
        %v496 = vmin.f32 %v464, 15.0
        %v497 = vmin.f32 %v465, 15.0
        %v498 = vmin.f32 %v466, 15.0
        %vm499 = vcmp.eq.f32.partialorder %v307, %v371
        %vm500 = vcmp.eq.f32.partialorder %v308, %v372
        %vm501 = vcmp.eq.f32.partialorder %v309, %v373
        %vm502 = vcmp.eq.f32.partialorder %v310, %v374
        %vm503 = vcmp.eq.f32.partialorder %v311, %v375
        %vm504 = vcmp.eq.f32.partialorder %v312, %v376
        %vm505 = vcmp.eq.f32.partialorder %v313, %v377
        %vm506 = vcmp.eq.f32.partialorder %v314, %v378
        %vm507 = vcmp.eq.f32.partialorder %v315, %v379
        %vm508 = vcmp.eq.f32.partialorder %v316, %v380
        %vm509 = vcmp.eq.f32.partialorder %v317, %v381
        %vm510 = vcmp.eq.f32.partialorder %v318, %v382
        %vm511 = vcmp.eq.f32.partialorder %v319, %v383
        %vm512 = vcmp.eq.f32.partialorder %v320, %v384
        %vm513 = vcmp.eq.f32.partialorder %v321, %v385
        %vm514 = vcmp.eq.f32.partialorder %v322, %v386
        %vm515 = vcmp.eq.f32.partialorder %v323, %v387
        %vm516 = vcmp.eq.f32.partialorder %v324, %v388
        %vm517 = vcmp.eq.f32.partialorder %v325, %v389
        %vm518 = vcmp.eq.f32.partialorder %v326, %v390
        %vm519 = vcmp.eq.f32.partialorder %v327, %v391
        %vm520 = vcmp.eq.f32.partialorder %v328, %v392
        %vm521 = vcmp.eq.f32.partialorder %v329, %v393
        %vm522 = vcmp.eq.f32.partialorder %v330, %v394
        %vm523 = vcmp.eq.f32.partialorder %v331, %v395
        %vm524 = vcmp.eq.f32.partialorder %v332, %v396
        %vm525 = vcmp.eq.f32.partialorder %v333, %v397
        %vm526 = vcmp.eq.f32.partialorder %v334, %v398
        %vm527 = vcmp.eq.f32.partialorder %v335, %v399
        %vm528 = vcmp.eq.f32.partialorder %v336, %v400
        %vm529 = vcmp.eq.f32.partialorder %v337, %v401
        %vm530 = vcmp.eq.f32.partialorder %v338, %v402
        %v531 = vsub.f32 %v275, %v371
        %v532 = vsub.f32 %v276, %v372
        %v533 = vsub.f32 %v277, %v373
        %v534 = vsub.f32 %v278, %v374
        %v535 = vsub.f32 %v279, %v375
        %v536 = vsub.f32 %v280, %v376
        %v537 = vsub.f32 %v281, %v377
        %v538 = vsub.f32 %v282, %v378
        %v539 = vsub.f32 %v283, %v379
        %v540 = vsub.f32 %v284, %v380
        %v541 = vsub.f32 %v285, %v381
        %v542 = vsub.f32 %v286, %v382
        %v543 = vsub.f32 %v287, %v383
        %v544 = vsub.f32 %v288, %v384
        %v545 = vsub.f32 %v289, %v385
        %v546 = vsub.f32 %v290, %v386
        %v547 = vsub.f32 %v291, %v387
        %v548 = vsub.f32 %v292, %v388
        %v549 = vsub.f32 %v293, %v389
        %v550 = vsub.f32 %v294, %v390
        %v551 = vsub.f32 %v295, %v391
        %v552 = vsub.f32 %v296, %v392
        %v553 = vsub.f32 %v297, %v393
        %v554 = vsub.f32 %v298, %v394
        %v555 = vsub.f32 %v299, %v395
        %v556 = vsub.f32 %v300, %v396
        %v557 = vsub.f32 %v301, %v397
        %v558 = vsub.f32 %v302, %v398
        %v559 = vsub.f32 %v303, %v399
        %v560 = vsub.f32 %v304, %v400
        %v561 = vsub.f32 %v305, %v401
        %v562 = vsub.f32 %v306, %v402
        %v563 = vand.u32 2147483647, %v531
        %v564 = vand.u32 2147483647, %v532
        %v565 = vand.u32 2147483647, %v533
        %v566 = vand.u32 2147483647, %v534
        %v567 = vand.u32 2147483647, %v535
        %v568 = vand.u32 2147483647, %v536
        %v569 = vand.u32 2147483647, %v537
        %v570 = vand.u32 2147483647, %v538
        %v571 = vand.u32 2147483647, %v539
        %v572 = vand.u32 2147483647, %v540
        %v573 = vand.u32 2147483647, %v541
        %v574 = vand.u32 2147483647, %v542
        %v575 = vand.u32 2147483647, %v543
        %v576 = vand.u32 2147483647, %v544
        %v577 = vand.u32 2147483647, %v545
        %v578 = vand.u32 2147483647, %v546
        %v579 = vand.u32 2147483647, %v547
        %v580 = vand.u32 2147483647, %v548
        %v581 = vand.u32 2147483647, %v549
        %v582 = vand.u32 2147483647, %v550
        %v583 = vand.u32 2147483647, %v551
        %v584 = vand.u32 2147483647, %v552
        %v585 = vand.u32 2147483647, %v553
        %v586 = vand.u32 2147483647, %v554
        %v587 = vand.u32 2147483647, %v555
        %v588 = vand.u32 2147483647, %v556
        %v589 = vand.u32 2147483647, %v557
        %v590 = vand.u32 2147483647, %v558
        %v591 = vand.u32 2147483647, %v559
        %v592 = vand.u32 2147483647, %v560
        %v593 = vand.u32 2147483647, %v561
        %v594 = vand.u32 2147483647, %v562
        %v595 = vsub.f32 1.0, %v563
        %v596 = vsub.f32 1.0, %v564
        %v597 = vsub.f32 1.0, %v565
        %v598 = vsub.f32 1.0, %v566
        %v599 = vsub.f32 1.0, %v567
        %v600 = vsub.f32 1.0, %v568
        %v601 = vsub.f32 1.0, %v569
        %v602 = vsub.f32 1.0, %v570
        %v603 = vsub.f32 1.0, %v571
        %v604 = vsub.f32 1.0, %v572
        %v605 = vsub.f32 1.0, %v573
        %v606 = vsub.f32 1.0, %v574
        %v607 = vsub.f32 1.0, %v575
        %v608 = vsub.f32 1.0, %v576
        %v609 = vsub.f32 1.0, %v577
        %v610 = vsub.f32 1.0, %v578
        %v611 = vsub.f32 1.0, %v579
        %v612 = vsub.f32 1.0, %v580
        %v613 = vsub.f32 1.0, %v581
        %v614 = vsub.f32 1.0, %v582
        %v615 = vsub.f32 1.0, %v583
        %v616 = vsub.f32 1.0, %v584
        %v617 = vsub.f32 1.0, %v585
        %v618 = vsub.f32 1.0, %v586
        %v619 = vsub.f32 1.0, %v587
        %v620 = vsub.f32 1.0, %v588
        %v621 = vsub.f32 1.0, %v589
        %v622 = vsub.f32 1.0, %v590
        %v623 = vsub.f32 1.0, %v591
        %v624 = vsub.f32 1.0, %v592
        %v625 = vsub.f32 1.0, %v593
        %v626 = vsub.f32 1.0, %v594
        %v627 = vsel %vm499, %v595, 0.0
        %v628 = vsel %vm500, %v596, 0.0
        %v629 = vsel %vm501, %v597, 0.0
        %v630 = vsel %vm502, %v598, 0.0
        %v631 = vsel %vm503, %v599, 0.0
        %v632 = vsel %vm504, %v600, 0.0
        %v633 = vsel %vm505, %v601, 0.0
        %v634 = vsel %vm506, %v602, 0.0
        %v635 = vsel %vm507, %v603, 0.0
        %v636 = vsel %vm508, %v604, 0.0
        %v637 = vsel %vm509, %v605, 0.0
        %v638 = vsel %vm510, %v606, 0.0
        %v639 = vsel %vm511, %v607, 0.0
        %v640 = vsel %vm512, %v608, 0.0
        %v641 = vsel %vm513, %v609, 0.0
        %v642 = vsel %vm514, %v610, 0.0
        %v643 = vsel %vm515, %v611, 0.0
        %v644 = vsel %vm516, %v612, 0.0
        %v645 = vsel %vm517, %v613, 0.0
        %v646 = vsel %vm518, %v614, 0.0
        %v647 = vsel %vm519, %v615, 0.0
        %v648 = vsel %vm520, %v616, 0.0
        %v649 = vsel %vm521, %v617, 0.0
        %v650 = vsel %vm522, %v618, 0.0
        %v651 = vsel %vm523, %v619, 0.0
        %v652 = vsel %vm524, %v620, 0.0
        %v653 = vsel %vm525, %v621, 0.0
        %v654 = vsel %vm526, %v622, 0.0
        %v655 = vsel %vm527, %v623, 0.0
        %v656 = vsel %vm528, %v624, 0.0
        %v657 = vsel %vm529, %v625, 0.0
        %v658 = vsel %vm530, %v626, 0.0
        %vm659 = vcmp.eq.f32.partialorder %v403, %v467
        %vm660 = vcmp.eq.f32.partialorder %v404, %v468
        %vm661 = vcmp.eq.f32.partialorder %v405, %v469
        %vm662 = vcmp.eq.f32.partialorder %v406, %v470
        %vm663 = vcmp.eq.f32.partialorder %v407, %v471
        %vm664 = vcmp.eq.f32.partialorder %v408, %v472
        %vm665 = vcmp.eq.f32.partialorder %v409, %v473
        %vm666 = vcmp.eq.f32.partialorder %v410, %v474
        %vm667 = vcmp.eq.f32.partialorder %v411, %v475
        %vm668 = vcmp.eq.f32.partialorder %v412, %v476
        %vm669 = vcmp.eq.f32.partialorder %v413, %v477
        %vm670 = vcmp.eq.f32.partialorder %v414, %v478
        %vm671 = vcmp.eq.f32.partialorder %v415, %v479
        %vm672 = vcmp.eq.f32.partialorder %v416, %v480
        %vm673 = vcmp.eq.f32.partialorder %v417, %v481
        %vm674 = vcmp.eq.f32.partialorder %v418, %v482
        %vm675 = vcmp.eq.f32.partialorder %v419, %v483
        %vm676 = vcmp.eq.f32.partialorder %v420, %v484
        %vm677 = vcmp.eq.f32.partialorder %v421, %v485
        %vm678 = vcmp.eq.f32.partialorder %v422, %v486
        %vm679 = vcmp.eq.f32.partialorder %v423, %v487
        %vm680 = vcmp.eq.f32.partialorder %v424, %v488
        %vm681 = vcmp.eq.f32.partialorder %v425, %v489
        %vm682 = vcmp.eq.f32.partialorder %v426, %v490
        %vm683 = vcmp.eq.f32.partialorder %v427, %v491
        %vm684 = vcmp.eq.f32.partialorder %v428, %v492
        %vm685 = vcmp.eq.f32.partialorder %v429, %v493
        %vm686 = vcmp.eq.f32.partialorder %v430, %v494
        %vm687 = vcmp.eq.f32.partialorder %v431, %v495
        %vm688 = vcmp.eq.f32.partialorder %v432, %v496
        %vm689 = vcmp.eq.f32.partialorder %v433, %v497
        %vm690 = vcmp.eq.f32.partialorder %v434, %v498
        %v691 = vsub.f32 %v275, %v467
        %v692 = vsub.f32 %v276, %v468
        %v693 = vsub.f32 %v277, %v469
        %v694 = vsub.f32 %v278, %v470
        %v695 = vsub.f32 %v279, %v471
        %v696 = vsub.f32 %v280, %v472
        %v697 = vsub.f32 %v281, %v473
        %v698 = vsub.f32 %v282, %v474
        %v699 = vsub.f32 %v283, %v475
        %v700 = vsub.f32 %v284, %v476
        %v701 = vsub.f32 %v285, %v477
        %v702 = vsub.f32 %v286, %v478
        %v703 = vsub.f32 %v287, %v479
        %v704 = vsub.f32 %v288, %v480
        %v705 = vsub.f32 %v289, %v481
        %v706 = vsub.f32 %v290, %v482
        %v707 = vsub.f32 %v291, %v483
        %v708 = vsub.f32 %v292, %v484
        %v709 = vsub.f32 %v293, %v485
        %v710 = vsub.f32 %v294, %v486
        %v711 = vsub.f32 %v295, %v487
        %v712 = vsub.f32 %v296, %v488
        %v713 = vsub.f32 %v297, %v489
        %v714 = vsub.f32 %v298, %v490
        %v715 = vsub.f32 %v299, %v491
        %v716 = vsub.f32 %v300, %v492
        %v717 = vsub.f32 %v301, %v493
        %v718 = vsub.f32 %v302, %v494
        %v719 = vsub.f32 %v303, %v495
        %v720 = vsub.f32 %v304, %v496
        %v721 = vsub.f32 %v305, %v497
        %v722 = vsub.f32 %v306, %v498
        %v723 = vand.u32 2147483647, %v691
        %v724 = vand.u32 2147483647, %v692
        %v725 = vand.u32 2147483647, %v693
        %v726 = vand.u32 2147483647, %v694
        %v727 = vand.u32 2147483647, %v695
        %v728 = vand.u32 2147483647, %v696
        %v729 = vand.u32 2147483647, %v697
        %v730 = vand.u32 2147483647, %v698
        %v731 = vand.u32 2147483647, %v699
        %v732 = vand.u32 2147483647, %v700
        %v733 = vand.u32 2147483647, %v701
        %v734 = vand.u32 2147483647, %v702
        %v735 = vand.u32 2147483647, %v703
        %v736 = vand.u32 2147483647, %v704
        %v737 = vand.u32 2147483647, %v705
        %v738 = vand.u32 2147483647, %v706
        %v739 = vand.u32 2147483647, %v707
        %v740 = vand.u32 2147483647, %v708
        %v741 = vand.u32 2147483647, %v709
        %v742 = vand.u32 2147483647, %v710
        %v743 = vand.u32 2147483647, %v711
        %v744 = vand.u32 2147483647, %v712
        %v745 = vand.u32 2147483647, %v713
        %v746 = vand.u32 2147483647, %v714
        %v747 = vand.u32 2147483647, %v715
        %v748 = vand.u32 2147483647, %v716
        %v749 = vand.u32 2147483647, %v717
        %v750 = vand.u32 2147483647, %v718
        %v751 = vand.u32 2147483647, %v719
        %v752 = vand.u32 2147483647, %v720
        %v753 = vand.u32 2147483647, %v721
        %v754 = vand.u32 2147483647, %v722
        %v755 = vsub.f32 1.0, %v723
        %v756 = vsub.f32 1.0, %v724
        %v757 = vsub.f32 1.0, %v725
        %v758 = vsub.f32 1.0, %v726
        %v759 = vsub.f32 1.0, %v727
        %v760 = vsub.f32 1.0, %v728
        %v761 = vsub.f32 1.0, %v729
        %v762 = vsub.f32 1.0, %v730
        %v763 = vsub.f32 1.0, %v731
        %v764 = vsub.f32 1.0, %v732
        %v765 = vsub.f32 1.0, %v733
        %v766 = vsub.f32 1.0, %v734
        %v767 = vsub.f32 1.0, %v735
        %v768 = vsub.f32 1.0, %v736
        %v769 = vsub.f32 1.0, %v737
        %v770 = vsub.f32 1.0, %v738
        %v771 = vsub.f32 1.0, %v739
        %v772 = vsub.f32 1.0, %v740
        %v773 = vsub.f32 1.0, %v741
        %v774 = vsub.f32 1.0, %v742
        %v775 = vsub.f32 1.0, %v743
        %v776 = vsub.f32 1.0, %v744
        %v777 = vsub.f32 1.0, %v745
        %v778 = vsub.f32 1.0, %v746
        %v779 = vsub.f32 1.0, %v747
        %v780 = vsub.f32 1.0, %v748
        %v781 = vsub.f32 1.0, %v749
        %v782 = vsub.f32 1.0, %v750
        %v783 = vsub.f32 1.0, %v751
        %v784 = vsub.f32 1.0, %v752
        %v785 = vsub.f32 1.0, %v753
        %v786 = vsub.f32 1.0, %v754
        %v787 = vsel %vm659, %v755, 0.0
        %v788 = vsel %vm660, %v756, 0.0
        %v789 = vsel %vm661, %v757, 0.0
        %v790 = vsel %vm662, %v758, 0.0
        %v791 = vsel %vm663, %v759, 0.0
        %v792 = vsel %vm664, %v760, 0.0
        %v793 = vsel %vm665, %v761, 0.0
        %v794 = vsel %vm666, %v762, 0.0
        %v795 = vsel %vm667, %v763, 0.0
        %v796 = vsel %vm668, %v764, 0.0
        %v797 = vsel %vm669, %v765, 0.0
        %v798 = vsel %vm670, %v766, 0.0
        %v799 = vsel %vm671, %v767, 0.0
        %v800 = vsel %vm672, %v768, 0.0
        %v801 = vsel %vm673, %v769, 0.0
        %v802 = vsel %vm674, %v770, 0.0
        %v803 = vsel %vm675, %v771, 0.0
        %v804 = vsel %vm676, %v772, 0.0
        %v805 = vsel %vm677, %v773, 0.0
        %v806 = vsel %vm678, %v774, 0.0
        %v807 = vsel %vm679, %v775, 0.0
        %v808 = vsel %vm680, %v776, 0.0
        %v809 = vsel %vm681, %v777, 0.0
        %v810 = vsel %vm682, %v778, 0.0
        %v811 = vsel %vm683, %v779, 0.0
        %v812 = vsel %vm684, %v780, 0.0
        %v813 = vsel %vm685, %v781, 0.0
        %v814 = vsel %vm686, %v782, 0.0
        %v815 = vsel %vm687, %v783, 0.0
        %v816 = vsel %vm688, %v784, 0.0
        %v817 = vsel %vm689, %v785, 0.0
        %v818 = vsel %vm690, %v786, 0.0
        %v819 = vlaneseq
        %v820 = vand.u32 %v819, 127
        %v821 = vcvt.s32.f32 %v820
        %823 = vset.pattern.permute.xlu0 0
        %824 = vperm.xlu0 %823, %v467
        %v825 = vpop.permute.xlu0 %824
        %828 = vset.pattern.permute.xlu0 0
        %829 = vperm.xlu0 %828, %v468
        %v830 = vpop.permute.xlu0 %829
        %833 = vset.pattern.permute.xlu0 0
        %834 = vperm.xlu0 %833, %v469
        %v835 = vpop.permute.xlu0 %834
        %838 = vset.pattern.permute.xlu0 0
        %839 = vperm.xlu0 %838, %v470
        %v840 = vpop.permute.xlu0 %839
        %843 = vset.pattern.permute.xlu0 0
        %844 = vperm.xlu0 %843, %v471
        %v845 = vpop.permute.xlu0 %844
        %848 = vset.pattern.permute.xlu0 0
        %849 = vperm.xlu0 %848, %v472
        %v850 = vpop.permute.xlu0 %849
        %853 = vset.pattern.permute.xlu0 0
        %854 = vperm.xlu0 %853, %v473
        %v855 = vpop.permute.xlu0 %854
        %858 = vset.pattern.permute.xlu0 0
        %859 = vperm.xlu0 %858, %v474
        %v860 = vpop.permute.xlu0 %859
        %863 = vset.pattern.permute.xlu0 0
        %864 = vperm.xlu0 %863, %v475
        %v865 = vpop.permute.xlu0 %864
        %868 = vset.pattern.permute.xlu0 0
        %869 = vperm.xlu0 %868, %v476
        %v870 = vpop.permute.xlu0 %869
        %873 = vset.pattern.permute.xlu0 0
        %874 = vperm.xlu0 %873, %v477
        %v875 = vpop.permute.xlu0 %874
        %878 = vset.pattern.permute.xlu0 0
        %879 = vperm.xlu0 %878, %v478
        %v880 = vpop.permute.xlu0 %879
        %883 = vset.pattern.permute.xlu0 0
        %884 = vperm.xlu0 %883, %v479
        %v885 = vpop.permute.xlu0 %884
        %888 = vset.pattern.permute.xlu0 0
        %889 = vperm.xlu0 %888, %v480
        %v890 = vpop.permute.xlu0 %889
        %893 = vset.pattern.permute.xlu0 0
        %894 = vperm.xlu0 %893, %v481
        %v895 = vpop.permute.xlu0 %894
        %898 = vset.pattern.permute.xlu0 0
        %899 = vperm.xlu0 %898, %v482
        %v900 = vpop.permute.xlu0 %899
        %903 = vset.pattern.permute.xlu0 0
        %904 = vperm.xlu0 %903, %v483
        %v905 = vpop.permute.xlu0 %904
        %908 = vset.pattern.permute.xlu0 0
        %909 = vperm.xlu0 %908, %v484
        %v910 = vpop.permute.xlu0 %909
        %913 = vset.pattern.permute.xlu0 0
        %914 = vperm.xlu0 %913, %v485
        %v915 = vpop.permute.xlu0 %914
        %918 = vset.pattern.permute.xlu0 0
        %919 = vperm.xlu0 %918, %v486
        %v920 = vpop.permute.xlu0 %919
        %923 = vset.pattern.permute.xlu0 0
        %924 = vperm.xlu0 %923, %v487
        %v925 = vpop.permute.xlu0 %924
        %928 = vset.pattern.permute.xlu0 0
        %929 = vperm.xlu0 %928, %v488
        %v930 = vpop.permute.xlu0 %929
        %933 = vset.pattern.permute.xlu0 0
        %934 = vperm.xlu0 %933, %v489
        %v935 = vpop.permute.xlu0 %934
        %938 = vset.pattern.permute.xlu0 0
        %939 = vperm.xlu0 %938, %v490
        %v940 = vpop.permute.xlu0 %939
        %943 = vset.pattern.permute.xlu0 0
        %944 = vperm.xlu0 %943, %v491
        %v945 = vpop.permute.xlu0 %944
        %948 = vset.pattern.permute.xlu0 0
        %949 = vperm.xlu0 %948, %v492
        %v950 = vpop.permute.xlu0 %949
        %953 = vset.pattern.permute.xlu0 0
        %954 = vperm.xlu0 %953, %v493
        %v955 = vpop.permute.xlu0 %954
        %958 = vset.pattern.permute.xlu0 0
        %959 = vperm.xlu0 %958, %v494
        %v960 = vpop.permute.xlu0 %959
        %963 = vset.pattern.permute.xlu0 0
        %964 = vperm.xlu0 %963, %v495
        %v965 = vpop.permute.xlu0 %964
        %968 = vset.pattern.permute.xlu0 0
        %969 = vperm.xlu0 %968, %v496
        %v970 = vpop.permute.xlu0 %969
        %973 = vset.pattern.permute.xlu0 0
        %974 = vperm.xlu0 %973, %v497
        %v975 = vpop.permute.xlu0 %974
        %978 = vset.pattern.permute.xlu0 0
        %979 = vperm.xlu0 %978, %v498
        %v980 = vpop.permute.xlu0 %979
        %vm982 = vcmp.eq.f32.partialorder %v821, %v825
        %vm983 = vcmp.eq.f32.partialorder %v821, %v830
        %vm984 = vcmp.eq.f32.partialorder %v821, %v835
        %vm985 = vcmp.eq.f32.partialorder %v821, %v840
        %vm986 = vcmp.eq.f32.partialorder %v821, %v845
        %vm987 = vcmp.eq.f32.partialorder %v821, %v850
        %vm988 = vcmp.eq.f32.partialorder %v821, %v855
        %vm989 = vcmp.eq.f32.partialorder %v821, %v860
        %vm990 = vcmp.eq.f32.partialorder %v821, %v865
        %vm991 = vcmp.eq.f32.partialorder %v821, %v870
        %vm992 = vcmp.eq.f32.partialorder %v821, %v875
        %vm993 = vcmp.eq.f32.partialorder %v821, %v880
        %vm994 = vcmp.eq.f32.partialorder %v821, %v885
        %vm995 = vcmp.eq.f32.partialorder %v821, %v890
        %vm996 = vcmp.eq.f32.partialorder %v821, %v895
        %vm997 = vcmp.eq.f32.partialorder %v821, %v900
        %vm998 = vcmp.eq.f32.partialorder %v821, %v905
        %vm999 = vcmp.eq.f32.partialorder %v821, %v910
        %vm1000 = vcmp.eq.f32.partialorder %v821, %v915
        %vm1001 = vcmp.eq.f32.partialorder %v821, %v920
        %vm1002 = vcmp.eq.f32.partialorder %v821, %v925
        %vm1003 = vcmp.eq.f32.partialorder %v821, %v930
        %vm1004 = vcmp.eq.f32.partialorder %v821, %v935
        %vm1005 = vcmp.eq.f32.partialorder %v821, %v940
        %vm1006 = vcmp.eq.f32.partialorder %v821, %v945
        %vm1007 = vcmp.eq.f32.partialorder %v821, %v950
        %vm1008 = vcmp.eq.f32.partialorder %v821, %v955
        %vm1009 = vcmp.eq.f32.partialorder %v821, %v960
        %vm1010 = vcmp.eq.f32.partialorder %v821, %v965
        %vm1011 = vcmp.eq.f32.partialorder %v821, %v970
        %vm1012 = vcmp.eq.f32.partialorder %v821, %v975
        %vm1013 = vcmp.eq.f32.partialorder %v821, %v980
        %1015 = vset.pattern.permute.xlu0 0
        %1016 = vperm.xlu0 %1015, %v787
        %v1017 = vpop.permute.xlu0 %1016
        %1020 = vset.pattern.permute.xlu0 0
        %1021 = vperm.xlu0 %1020, %v788
        %v1022 = vpop.permute.xlu0 %1021
        %1025 = vset.pattern.permute.xlu0 0
        %1026 = vperm.xlu0 %1025, %v789
        %v1027 = vpop.permute.xlu0 %1026
        %1030 = vset.pattern.permute.xlu0 0
        %1031 = vperm.xlu0 %1030, %v790
        %v1032 = vpop.permute.xlu0 %1031
        %1035 = vset.pattern.permute.xlu0 0
        %1036 = vperm.xlu0 %1035, %v791
        %v1037 = vpop.permute.xlu0 %1036
        %1040 = vset.pattern.permute.xlu0 0
        %1041 = vperm.xlu0 %1040, %v792
        %v1042 = vpop.permute.xlu0 %1041
        %1045 = vset.pattern.permute.xlu0 0
        %1046 = vperm.xlu0 %1045, %v793
        %v1047 = vpop.permute.xlu0 %1046
        %1050 = vset.pattern.permute.xlu0 0
        %1051 = vperm.xlu0 %1050, %v794
        %v1052 = vpop.permute.xlu0 %1051
        %1055 = vset.pattern.permute.xlu0 0
        %1056 = vperm.xlu0 %1055, %v795
        %v1057 = vpop.permute.xlu0 %1056
        %1060 = vset.pattern.permute.xlu0 0
        %1061 = vperm.xlu0 %1060, %v796
        %v1062 = vpop.permute.xlu0 %1061
        %1065 = vset.pattern.permute.xlu0 0
        %1066 = vperm.xlu0 %1065, %v797
        %v1067 = vpop.permute.xlu0 %1066
        %1070 = vset.pattern.permute.xlu0 0
        %1071 = vperm.xlu0 %1070, %v798
        %v1072 = vpop.permute.xlu0 %1071
        %1075 = vset.pattern.permute.xlu0 0
        %1076 = vperm.xlu0 %1075, %v799
        %v1077 = vpop.permute.xlu0 %1076
        %1080 = vset.pattern.permute.xlu0 0
        %1081 = vperm.xlu0 %1080, %v800
        %v1082 = vpop.permute.xlu0 %1081
        %1085 = vset.pattern.permute.xlu0 0
        %1086 = vperm.xlu0 %1085, %v801
        %v1087 = vpop.permute.xlu0 %1086
        %1090 = vset.pattern.permute.xlu0 0
        %1091 = vperm.xlu0 %1090, %v802
        %v1092 = vpop.permute.xlu0 %1091
        %1095 = vset.pattern.permute.xlu0 0
        %1096 = vperm.xlu0 %1095, %v803
        %v1097 = vpop.permute.xlu0 %1096
        %1100 = vset.pattern.permute.xlu0 0
        %1101 = vperm.xlu0 %1100, %v804
        %v1102 = vpop.permute.xlu0 %1101
        %1105 = vset.pattern.permute.xlu0 0
        %1106 = vperm.xlu0 %1105, %v805
        %v1107 = vpop.permute.xlu0 %1106
        %1110 = vset.pattern.permute.xlu0 0
        %1111 = vperm.xlu0 %1110, %v806
        %v1112 = vpop.permute.xlu0 %1111
        %1115 = vset.pattern.permute.xlu0 0
        %1116 = vperm.xlu0 %1115, %v807
        %v1117 = vpop.permute.xlu0 %1116
        %1120 = vset.pattern.permute.xlu0 0
        %1121 = vperm.xlu0 %1120, %v808
        %v1122 = vpop.permute.xlu0 %1121
        %1125 = vset.pattern.permute.xlu0 0
        %1126 = vperm.xlu0 %1125, %v809
        %v1127 = vpop.permute.xlu0 %1126
        %1130 = vset.pattern.permute.xlu0 0
        %1131 = vperm.xlu0 %1130, %v810
        %v1132 = vpop.permute.xlu0 %1131
        %1135 = vset.pattern.permute.xlu0 0
        %1136 = vperm.xlu0 %1135, %v811
        %v1137 = vpop.permute.xlu0 %1136
        %1140 = vset.pattern.permute.xlu0 0
        %1141 = vperm.xlu0 %1140, %v812
        %v1142 = vpop.permute.xlu0 %1141
        %1145 = vset.pattern.permute.xlu0 0
        %1146 = vperm.xlu0 %1145, %v813
        %v1147 = vpop.permute.xlu0 %1146
        %1150 = vset.pattern.permute.xlu0 0
        %1151 = vperm.xlu0 %1150, %v814
        %v1152 = vpop.permute.xlu0 %1151
        %1155 = vset.pattern.permute.xlu0 0
        %1156 = vperm.xlu0 %1155, %v815
        %v1157 = vpop.permute.xlu0 %1156
        %1160 = vset.pattern.permute.xlu0 0
        %1161 = vperm.xlu0 %1160, %v816
        %v1162 = vpop.permute.xlu0 %1161
        %1165 = vset.pattern.permute.xlu0 0
        %1166 = vperm.xlu0 %1165, %v817
        %v1167 = vpop.permute.xlu0 %1166
        %1170 = vset.pattern.permute.xlu0 0
        %1171 = vperm.xlu0 %1170, %v818
        %v1172 = vpop.permute.xlu0 %1171
        %v1174 = vsel %vm982, %v1017, 0.0
        %v1175 = vsel %vm983, %v1022, 0.0
        %v1176 = vsel %vm984, %v1027, 0.0
        %v1177 = vsel %vm985, %v1032, 0.0
        %v1178 = vsel %vm986, %v1037, 0.0
        %v1179 = vsel %vm987, %v1042, 0.0
        %v1180 = vsel %vm988, %v1047, 0.0
        %v1181 = vsel %vm989, %v1052, 0.0
        %v1182 = vsel %vm990, %v1057, 0.0
        %v1183 = vsel %vm991, %v1062, 0.0
        %v1184 = vsel %vm992, %v1067, 0.0
        %v1185 = vsel %vm993, %v1072, 0.0
        %v1186 = vsel %vm994, %v1077, 0.0
        %v1187 = vsel %vm995, %v1082, 0.0
        %v1188 = vsel %vm996, %v1087, 0.0
        %v1189 = vsel %vm997, %v1092, 0.0
        %v1190 = vsel %vm998, %v1097, 0.0
        %v1191 = vsel %vm999, %v1102, 0.0
        %v1192 = vsel %vm1000, %v1107, 0.0
        %v1193 = vsel %vm1001, %v1112, 0.0
        %v1194 = vsel %vm1002, %v1117, 0.0
        %v1195 = vsel %vm1003, %v1122, 0.0
        %v1196 = vsel %vm1004, %v1127, 0.0
        %v1197 = vsel %vm1005, %v1132, 0.0
        %v1198 = vsel %vm1006, %v1137, 0.0
        %v1199 = vsel %vm1007, %v1142, 0.0
        %v1200 = vsel %vm1008, %v1147, 0.0
        %v1201 = vsel %vm1009, %v1152, 0.0
        %v1202 = vsel %vm1010, %v1157, 0.0
        %v1203 = vsel %vm1011, %v1162, 0.0
        %v1204 = vsel %vm1012, %v1167, 0.0
        %v1205 = vsel %vm1013, %v1172, 0.0
        %1207 = vset.pattern.permute.xlu0 0
        %1208 = vperm.xlu0 %1207, %v371
        %v1209 = vpop.permute.xlu0 %1208
        %1212 = vset.pattern.permute.xlu0 0
        %1213 = vperm.xlu0 %1212, %v372
        %v1214 = vpop.permute.xlu0 %1213
        %1217 = vset.pattern.permute.xlu0 0
        %1218 = vperm.xlu0 %1217, %v373
        %v1219 = vpop.permute.xlu0 %1218
        %1222 = vset.pattern.permute.xlu0 0
        %1223 = vperm.xlu0 %1222, %v374
        %v1224 = vpop.permute.xlu0 %1223
        %1227 = vset.pattern.permute.xlu0 0
        %1228 = vperm.xlu0 %1227, %v375
        %v1229 = vpop.permute.xlu0 %1228
        %1232 = vset.pattern.permute.xlu0 0
        %1233 = vperm.xlu0 %1232, %v376
        %v1234 = vpop.permute.xlu0 %1233
        %1237 = vset.pattern.permute.xlu0 0
        %1238 = vperm.xlu0 %1237, %v377
        %v1239 = vpop.permute.xlu0 %1238
        %1242 = vset.pattern.permute.xlu0 0
        %1243 = vperm.xlu0 %1242, %v378
        %v1244 = vpop.permute.xlu0 %1243
        %1247 = vset.pattern.permute.xlu0 0
        %1248 = vperm.xlu0 %1247, %v379
        %v1249 = vpop.permute.xlu0 %1248
        %1252 = vset.pattern.permute.xlu0 0
        %1253 = vperm.xlu0 %1252, %v380
        %v1254 = vpop.permute.xlu0 %1253
        %1257 = vset.pattern.permute.xlu0 0
        %1258 = vperm.xlu0 %1257, %v381
        %v1259 = vpop.permute.xlu0 %1258
        %1262 = vset.pattern.permute.xlu0 0
        %1263 = vperm.xlu0 %1262, %v382
        %v1264 = vpop.permute.xlu0 %1263
        %1267 = vset.pattern.permute.xlu0 0
        %1268 = vperm.xlu0 %1267, %v383
        %v1269 = vpop.permute.xlu0 %1268
        %1272 = vset.pattern.permute.xlu0 0
        %1273 = vperm.xlu0 %1272, %v384
        %v1274 = vpop.permute.xlu0 %1273
        %1277 = vset.pattern.permute.xlu0 0
        %1278 = vperm.xlu0 %1277, %v385
        %v1279 = vpop.permute.xlu0 %1278
        %1282 = vset.pattern.permute.xlu0 0
        %1283 = vperm.xlu0 %1282, %v386
        %v1284 = vpop.permute.xlu0 %1283
        %1287 = vset.pattern.permute.xlu0 0
        %1288 = vperm.xlu0 %1287, %v387
        %v1289 = vpop.permute.xlu0 %1288
        %1292 = vset.pattern.permute.xlu0 0
        %1293 = vperm.xlu0 %1292, %v388
        %v1294 = vpop.permute.xlu0 %1293
        %1297 = vset.pattern.permute.xlu0 0
        %1298 = vperm.xlu0 %1297, %v389
        %v1299 = vpop.permute.xlu0 %1298
        %1302 = vset.pattern.permute.xlu0 0
        %1303 = vperm.xlu0 %1302, %v390
        %v1304 = vpop.permute.xlu0 %1303
        %1307 = vset.pattern.permute.xlu0 0
        %1308 = vperm.xlu0 %1307, %v391
        %v1309 = vpop.permute.xlu0 %1308
        %1312 = vset.pattern.permute.xlu0 0
        %1313 = vperm.xlu0 %1312, %v392
        %v1314 = vpop.permute.xlu0 %1313
        %1317 = vset.pattern.permute.xlu0 0
        %1318 = vperm.xlu0 %1317, %v393
        %v1319 = vpop.permute.xlu0 %1318
        %1322 = vset.pattern.permute.xlu0 0
        %1323 = vperm.xlu0 %1322, %v394
        %v1324 = vpop.permute.xlu0 %1323
        %1327 = vset.pattern.permute.xlu0 0
        %1328 = vperm.xlu0 %1327, %v395
        %v1329 = vpop.permute.xlu0 %1328
        %1332 = vset.pattern.permute.xlu0 0
        %1333 = vperm.xlu0 %1332, %v396
        %v1334 = vpop.permute.xlu0 %1333
        %1337 = vset.pattern.permute.xlu0 0
        %1338 = vperm.xlu0 %1337, %v397
        %v1339 = vpop.permute.xlu0 %1338
        %1342 = vset.pattern.permute.xlu0 0
        %1343 = vperm.xlu0 %1342, %v398
        %v1344 = vpop.permute.xlu0 %1343
        %1347 = vset.pattern.permute.xlu0 0
        %1348 = vperm.xlu0 %1347, %v399
        %v1349 = vpop.permute.xlu0 %1348
        %1352 = vset.pattern.permute.xlu0 0
        %1353 = vperm.xlu0 %1352, %v400
        %v1354 = vpop.permute.xlu0 %1353
        %1357 = vset.pattern.permute.xlu0 0
        %1358 = vperm.xlu0 %1357, %v401
        %v1359 = vpop.permute.xlu0 %1358
        %1362 = vset.pattern.permute.xlu0 0
        %1363 = vperm.xlu0 %1362, %v402
        %v1364 = vpop.permute.xlu0 %1363
        %vm1366 = vcmp.eq.f32.partialorder %v821, %v1209
        %vm1367 = vcmp.eq.f32.partialorder %v821, %v1214
        %vm1368 = vcmp.eq.f32.partialorder %v821, %v1219
        %vm1369 = vcmp.eq.f32.partialorder %v821, %v1224
        %vm1370 = vcmp.eq.f32.partialorder %v821, %v1229
        %vm1371 = vcmp.eq.f32.partialorder %v821, %v1234
        %vm1372 = vcmp.eq.f32.partialorder %v821, %v1239
        %vm1373 = vcmp.eq.f32.partialorder %v821, %v1244
        %vm1374 = vcmp.eq.f32.partialorder %v821, %v1249
        %vm1375 = vcmp.eq.f32.partialorder %v821, %v1254
        %vm1376 = vcmp.eq.f32.partialorder %v821, %v1259
        %vm1377 = vcmp.eq.f32.partialorder %v821, %v1264
        %vm1378 = vcmp.eq.f32.partialorder %v821, %v1269
        %vm1379 = vcmp.eq.f32.partialorder %v821, %v1274
        %vm1380 = vcmp.eq.f32.partialorder %v821, %v1279
        %vm1381 = vcmp.eq.f32.partialorder %v821, %v1284
        %vm1382 = vcmp.eq.f32.partialorder %v821, %v1289
        %vm1383 = vcmp.eq.f32.partialorder %v821, %v1294
        %vm1384 = vcmp.eq.f32.partialorder %v821, %v1299
        %vm1385 = vcmp.eq.f32.partialorder %v821, %v1304
        %vm1386 = vcmp.eq.f32.partialorder %v821, %v1309
        %vm1387 = vcmp.eq.f32.partialorder %v821, %v1314
        %vm1388 = vcmp.eq.f32.partialorder %v821, %v1319
        %vm1389 = vcmp.eq.f32.partialorder %v821, %v1324
        %vm1390 = vcmp.eq.f32.partialorder %v821, %v1329
        %vm1391 = vcmp.eq.f32.partialorder %v821, %v1334
        %vm1392 = vcmp.eq.f32.partialorder %v821, %v1339
        %vm1393 = vcmp.eq.f32.partialorder %v821, %v1344
        %vm1394 = vcmp.eq.f32.partialorder %v821, %v1349
        %vm1395 = vcmp.eq.f32.partialorder %v821, %v1354
        %vm1396 = vcmp.eq.f32.partialorder %v821, %v1359
        %vm1397 = vcmp.eq.f32.partialorder %v821, %v1364
        %1399 = vset.pattern.permute.xlu0 0
        %1400 = vperm.xlu0 %1399, %v627
        %v1401 = vpop.permute.xlu0 %1400
        %1404 = vset.pattern.permute.xlu0 0
        %1405 = vperm.xlu0 %1404, %v628
        %v1406 = vpop.permute.xlu0 %1405
        %1409 = vset.pattern.permute.xlu0 0
        %1410 = vperm.xlu0 %1409, %v629
        %v1411 = vpop.permute.xlu0 %1410
        %1414 = vset.pattern.permute.xlu0 0
        %1415 = vperm.xlu0 %1414, %v630
        %v1416 = vpop.permute.xlu0 %1415
        %1419 = vset.pattern.permute.xlu0 0
        %1420 = vperm.xlu0 %1419, %v631
        %v1421 = vpop.permute.xlu0 %1420
        %1424 = vset.pattern.permute.xlu0 0
        %1425 = vperm.xlu0 %1424, %v632
        %v1426 = vpop.permute.xlu0 %1425
        %1429 = vset.pattern.permute.xlu0 0
        %1430 = vperm.xlu0 %1429, %v633
        %v1431 = vpop.permute.xlu0 %1430
        %1434 = vset.pattern.permute.xlu0 0
        %1435 = vperm.xlu0 %1434, %v634
        %v1436 = vpop.permute.xlu0 %1435
        %1439 = vset.pattern.permute.xlu0 0
        %1440 = vperm.xlu0 %1439, %v635
        %v1441 = vpop.permute.xlu0 %1440
        %1444 = vset.pattern.permute.xlu0 0
        %1445 = vperm.xlu0 %1444, %v636
        %v1446 = vpop.permute.xlu0 %1445
        %1449 = vset.pattern.permute.xlu0 0
        %1450 = vperm.xlu0 %1449, %v637
        %v1451 = vpop.permute.xlu0 %1450
        %1454 = vset.pattern.permute.xlu0 0
        %1455 = vperm.xlu0 %1454, %v638
        %v1456 = vpop.permute.xlu0 %1455
        %1459 = vset.pattern.permute.xlu0 0
        %1460 = vperm.xlu0 %1459, %v639
        %v1461 = vpop.permute.xlu0 %1460
        %1464 = vset.pattern.permute.xlu0 0
        %1465 = vperm.xlu0 %1464, %v640
        %v1466 = vpop.permute.xlu0 %1465
        %1469 = vset.pattern.permute.xlu0 0
        %1470 = vperm.xlu0 %1469, %v641
        %v1471 = vpop.permute.xlu0 %1470
        %1474 = vset.pattern.permute.xlu0 0
        %1475 = vperm.xlu0 %1474, %v642
        %v1476 = vpop.permute.xlu0 %1475
        %1479 = vset.pattern.permute.xlu0 0
        %1480 = vperm.xlu0 %1479, %v643
        %v1481 = vpop.permute.xlu0 %1480
        %1484 = vset.pattern.permute.xlu0 0
        %1485 = vperm.xlu0 %1484, %v644
        %v1486 = vpop.permute.xlu0 %1485
        %1489 = vset.pattern.permute.xlu0 0
        %1490 = vperm.xlu0 %1489, %v645
        %v1491 = vpop.permute.xlu0 %1490
        %1494 = vset.pattern.permute.xlu0 0
        %1495 = vperm.xlu0 %1494, %v646
        %v1496 = vpop.permute.xlu0 %1495
        %1499 = vset.pattern.permute.xlu0 0
        %1500 = vperm.xlu0 %1499, %v647
        %v1501 = vpop.permute.xlu0 %1500
        %1504 = vset.pattern.permute.xlu0 0
        %1505 = vperm.xlu0 %1504, %v648
        %v1506 = vpop.permute.xlu0 %1505
        %1509 = vset.pattern.permute.xlu0 0
        %1510 = vperm.xlu0 %1509, %v649
        %v1511 = vpop.permute.xlu0 %1510
        %1514 = vset.pattern.permute.xlu0 0
        %1515 = vperm.xlu0 %1514, %v650
        %v1516 = vpop.permute.xlu0 %1515
        %1519 = vset.pattern.permute.xlu0 0
        %1520 = vperm.xlu0 %1519, %v651
        %v1521 = vpop.permute.xlu0 %1520
        %1524 = vset.pattern.permute.xlu0 0
        %1525 = vperm.xlu0 %1524, %v652
        %v1526 = vpop.permute.xlu0 %1525
        %1529 = vset.pattern.permute.xlu0 0
        %1530 = vperm.xlu0 %1529, %v653
        %v1531 = vpop.permute.xlu0 %1530
        %1534 = vset.pattern.permute.xlu0 0
        %1535 = vperm.xlu0 %1534, %v654
        %v1536 = vpop.permute.xlu0 %1535
        %1539 = vset.pattern.permute.xlu0 0
        %1540 = vperm.xlu0 %1539, %v655
        %v1541 = vpop.permute.xlu0 %1540
        %1544 = vset.pattern.permute.xlu0 0
        %1545 = vperm.xlu0 %1544, %v656
        %v1546 = vpop.permute.xlu0 %1545
        %1549 = vset.pattern.permute.xlu0 0
        %1550 = vperm.xlu0 %1549, %v657
        %v1551 = vpop.permute.xlu0 %1550
        %1554 = vset.pattern.permute.xlu0 0
        %1555 = vperm.xlu0 %1554, %v658
        %v1556 = vpop.permute.xlu0 %1555
        %v1558 = vsel %vm1366, %v1401, 0.0
        %v1559 = vsel %vm1367, %v1406, 0.0
        %v1560 = vsel %vm1368, %v1411, 0.0
        %v1561 = vsel %vm1369, %v1416, 0.0
        %v1562 = vsel %vm1370, %v1421, 0.0
        %v1563 = vsel %vm1371, %v1426, 0.0
        %v1564 = vsel %vm1372, %v1431, 0.0
        %v1565 = vsel %vm1373, %v1436, 0.0
        %v1566 = vsel %vm1374, %v1441, 0.0
        %v1567 = vsel %vm1375, %v1446, 0.0
        %v1568 = vsel %vm1376, %v1451, 0.0
        %v1569 = vsel %vm1377, %v1456, 0.0
        %v1570 = vsel %vm1378, %v1461, 0.0
        %v1571 = vsel %vm1379, %v1466, 0.0
        %v1572 = vsel %vm1380, %v1471, 0.0
        %v1573 = vsel %vm1381, %v1476, 0.0
        %v1574 = vsel %vm1382, %v1481, 0.0
        %v1575 = vsel %vm1383, %v1486, 0.0
        %v1576 = vsel %vm1384, %v1491, 0.0
        %v1577 = vsel %vm1385, %v1496, 0.0
        %v1578 = vsel %vm1386, %v1501, 0.0
        %v1579 = vsel %vm1387, %v1506, 0.0
        %v1580 = vsel %vm1388, %v1511, 0.0
        %v1581 = vsel %vm1389, %v1516, 0.0
        %v1582 = vsel %vm1390, %v1521, 0.0
        %v1583 = vsel %vm1391, %v1526, 0.0
        %v1584 = vsel %vm1392, %v1531, 0.0
        %v1585 = vsel %vm1393, %v1536, 0.0
        %v1586 = vsel %vm1394, %v1541, 0.0
        %v1587 = vsel %vm1395, %v1546, 0.0
        %v1588 = vsel %vm1396, %v1551, 0.0
        %v1589 = vsel %vm1397, %v1556, 0.0
        %v1590 = vadd.f32 %v1174, %v1558
        %v1591 = vadd.f32 %v1175, %v1559
        %v1592 = vadd.f32 %v1176, %v1560
        %v1593 = vadd.f32 %v1177, %v1561
        %v1594 = vadd.f32 %v1178, %v1562
        %v1595 = vadd.f32 %v1179, %v1563
        %v1596 = vadd.f32 %v1180, %v1564
        %v1597 = vadd.f32 %v1181, %v1565
        %v1598 = vadd.f32 %v1182, %v1566
        %v1599 = vadd.f32 %v1183, %v1567
        %v1600 = vadd.f32 %v1184, %v1568
        %v1601 = vadd.f32 %v1185, %v1569
        %v1602 = vadd.f32 %v1186, %v1570
        %v1603 = vadd.f32 %v1187, %v1571
        %v1604 = vadd.f32 %v1188, %v1572
        %v1605 = vadd.f32 %v1189, %v1573
        %v1606 = vadd.f32 %v1190, %v1574
        %v1607 = vadd.f32 %v1191, %v1575
        %v1608 = vadd.f32 %v1192, %v1576
        %v1609 = vadd.f32 %v1193, %v1577
        %v1610 = vadd.f32 %v1194, %v1578
        %v1611 = vadd.f32 %v1195, %v1579
        %v1612 = vadd.f32 %v1196, %v1580
        %v1613 = vadd.f32 %v1197, %v1581
        %v1614 = vadd.f32 %v1198, %v1582
        %v1615 = vadd.f32 %v1199, %v1583
        %v1616 = vadd.f32 %v1200, %v1584
        %v1617 = vadd.f32 %v1201, %v1585
        %v1618 = vadd.f32 %v1202, %v1586
        %v1619 = vadd.f32 %v1203, %v1587
        %v1620 = vadd.f32 %v1204, %v1588
        %v1621 = vadd.f32 %v1205, %v1589
        %v1622 = vld [vmem:[%s233] sm:$0x3]
        %v1623 = vfloor.f32 %v1622
        %v1624 = vmax.f32 %v1623, 0.0
        %v1625 = vmin.f32 %v1624, 15.0
        %v1626 = vadd.f32 %v1623, 1.0
        %v1627 = vmax.f32 %v1626, 0.0
        %v1628 = vmin.f32 %v1627, 15.0
        %vm1629 = vcmp.eq.f32.partialorder %v1623, %v1625
        %v1630 = vsub.f32 %v1622, %v1625
        %v1631 = vand.u32 2147483647, %v1630
        %v1632 = vsub.f32 1.0, %v1631
        %v1633 = vsel %vm1629, %v1632, 0.0
        %vm1634 = vcmp.eq.f32.partialorder %v1626, %v1628
        %v1635 = vsub.f32 %v1622, %v1628
        %v1636 = vand.u32 2147483647, %v1635
        %v1637 = vsub.f32 1.0, %v1636
        %v1638 = vsel %vm1634, %v1637, 0.0
        %v1639 = vld [vmem:[#allocation2] sm:$0xff]
        %v1640 = vld [vmem:[#allocation2 + $0x8] sm:$0xff]
        %v1641 = vlaneseq
        %v1642 = vshrl.u32 %v1641, 7
        %v1643 = vadd.s32 %v1642, 8
        %v1644 = vcvt.s32.f32 %v1642
        %v1645 = vcvt.s32.f32 %v1643
        %v1646 = vadd.f32 %v1644, 0.0
        %v1647 = vadd.f32 %v1645, 0.0
        %v1649 = vlaneseq
        %v1650 = vshrl.u32 %v1649, 7
        %v1651 = vsub.s32 0, %v1650
        %v1652 = vrot.slane %v1628, %v1651
        %v1653 = vlaneseq
        %v1654 = vshrl.u32 %v1653, 7
        %v1655 = vsub.s32 1, %v1654
        %v1656 = vrot.slane %v1628, %v1655
        %vm1659 = vcmp.eq.f32.partialorder %v1646, %v1652
        %vm1660 = vcmp.eq.f32.partialorder %v1646, %v1656
        %vm1661 = vcmp.eq.f32.partialorder %v1647, %v1652
        %vm1662 = vcmp.eq.f32.partialorder %v1647, %v1656
        %v1664 = vlaneseq
        %v1665 = vshrl.u32 %v1664, 7
        %v1666 = vsub.s32 0, %v1665
        %v1667 = vrot.slane %v1638, %v1666
        %v1668 = vlaneseq
        %v1669 = vshrl.u32 %v1668, 7
        %v1670 = vsub.s32 1, %v1669
        %v1671 = vrot.slane %v1638, %v1670
        %v1674 = vsel %vm1659, %v1667, 0.0
        %v1675 = vsel %vm1660, %v1671, 0.0
        %v1676 = vsel %vm1661, %v1667, 0.0
        %v1677 = vsel %vm1662, %v1671, 0.0
        %v1679 = vlaneseq
        %v1680 = vshrl.u32 %v1679, 7
        %v1681 = vsub.s32 0, %v1680
        %v1682 = vrot.slane %v1625, %v1681
        %v1683 = vlaneseq
        %v1684 = vshrl.u32 %v1683, 7
        %v1685 = vsub.s32 1, %v1684
        %v1686 = vrot.slane %v1625, %v1685
        %vm1689 = vcmp.eq.f32.partialorder %v1646, %v1682
        %vm1690 = vcmp.eq.f32.partialorder %v1646, %v1686
        %vm1691 = vcmp.eq.f32.partialorder %v1647, %v1682
        %vm1692 = vcmp.eq.f32.partialorder %v1647, %v1686
        %v1694 = vlaneseq
        %v1695 = vshrl.u32 %v1694, 7
        %v1696 = vsub.s32 0, %v1695
        %v1697 = vrot.slane %v1633, %v1696
        %v1698 = vlaneseq
        %v1699 = vshrl.u32 %v1698, 7
        %v1700 = vsub.s32 1, %v1699
        %v1701 = vrot.slane %v1633, %v1700
        %v1704 = vsel %vm1689, %v1697, 0.0
        %v1705 = vsel %vm1690, %v1701, 0.0
        %v1706 = vsel %vm1691, %v1697, 0.0
        %v1707 = vsel %vm1692, %v1701, 0.0
        %v1708 = vadd.f32 %v1674, %v1704
        %v1709 = vadd.f32 %v1675, %v1705
        %v1710 = vadd.f32 %v1676, %v1706
        %v1711 = vadd.f32 %v1677, %v1707
        %1712 = vmatprep.subr.mxu0 0.0
        %v1713 = vand.u32 %v1590, 4294901760
        %1714 = vmatpush1.msra.mxu0 %v1713
        %1715 = vmatprep.subr.mxu0 0.0
        %v1716 = vand.u32 %v1591, 4294901760
        %1717 = vmatpush1.msra.mxu0 %v1716
        %1718 = vmatprep.subr.mxu0 0.0
        %v1719 = vand.u32 %v1592, 4294901760
        %1720 = vmatpush1.msra.mxu0 %v1719
        %1721 = vmatprep.subr.mxu0 0.0
        %v1722 = vand.u32 %v1593, 4294901760
        %1723 = vmatpush1.msra.mxu0 %v1722
        %1724 = vmatprep.subr.mxu0 0.0
        %v1725 = vand.u32 %v1594, 4294901760
        %1726 = vmatpush1.msra.mxu0 %v1725
        %1727 = vmatprep.subr.mxu0 0.0
        %v1728 = vand.u32 %v1595, 4294901760
        %1729 = vmatpush1.msra.mxu0 %v1728
        %1730 = vmatprep.subr.mxu0 0.0
        %v1731 = vand.u32 %v1596, 4294901760
        %1732 = vmatpush1.msra.mxu0 %v1731
        %1733 = vmatprep.subr.mxu0 0.0
        %v1734 = vand.u32 %v1597, 4294901760
        %1735 = vmatpush1.msra.mxu0 %v1734
        %1736 = vmatprep.subr.mxu0 0.0
        %v1737 = vand.u32 %v1598, 4294901760
        %1738 = vmatpush1.msra.mxu0 %v1737
        %1739 = vmatprep.subr.mxu0 0.0
        %v1740 = vand.u32 %v1599, 4294901760
        %1741 = vmatpush1.msra.mxu0 %v1740
        %1742 = vmatprep.subr.mxu0 0.0
        %v1743 = vand.u32 %v1600, 4294901760
        %1744 = vmatpush1.msra.mxu0 %v1743
        %1745 = vmatprep.subr.mxu0 0.0
        %v1746 = vand.u32 %v1601, 4294901760
        %1747 = vmatpush1.msra.mxu0 %v1746
        %1748 = vmatprep.subr.mxu0 0.0
        %v1749 = vand.u32 %v1602, 4294901760
        %1750 = vmatpush1.msra.mxu0 %v1749
        %1751 = vmatprep.subr.mxu0 0.0
        %v1752 = vand.u32 %v1603, 4294901760
        %1753 = vmatpush1.msra.mxu0 %v1752
        %1754 = vmatprep.subr.mxu0 0.0
        %v1755 = vand.u32 %v1604, 4294901760
        %1756 = vmatpush1.msra.mxu0 %v1755
        %1757 = vmatprep.subr.mxu0 0.0
        %v1758 = vand.u32 %v1605, 4294901760
        %1759 = vmatpush1.msra.mxu0 %v1758
        %1760 = vmatprep.subr.mxu0 0.0
        %v1761 = vand.u32 %v1606, 4294901760
        %1762 = vmatpush1.msra.mxu0 %v1761
        %1763 = vmatprep.subr.mxu0 0.0
        %v1764 = vand.u32 %v1607, 4294901760
        %1765 = vmatpush1.msra.mxu0 %v1764
        %1766 = vmatprep.subr.mxu0 0.0
        %v1767 = vand.u32 %v1608, 4294901760
        %1768 = vmatpush1.msra.mxu0 %v1767
        %1769 = vmatprep.subr.mxu0 0.0
        %v1770 = vand.u32 %v1609, 4294901760
        %1771 = vmatpush1.msra.mxu0 %v1770
        %1772 = vmatprep.subr.mxu0 0.0
        %v1773 = vand.u32 %v1610, 4294901760
        %1774 = vmatpush1.msra.mxu0 %v1773
        %1775 = vmatprep.subr.mxu0 0.0
        %v1776 = vand.u32 %v1611, 4294901760
        %1777 = vmatpush1.msra.mxu0 %v1776
        %1778 = vmatprep.subr.mxu0 0.0
        %v1779 = vand.u32 %v1612, 4294901760
        %1780 = vmatpush1.msra.mxu0 %v1779
        %1781 = vmatprep.subr.mxu0 0.0
        %v1782 = vand.u32 %v1613, 4294901760
        %1783 = vmatpush1.msra.mxu0 %v1782
        %1784 = vmatprep.subr.mxu0 0.0
        %v1785 = vand.u32 %v1614, 4294901760
        %1786 = vmatpush1.msra.mxu0 %v1785
        %1787 = vmatprep.subr.mxu0 0.0
        %v1788 = vand.u32 %v1615, 4294901760
        %1789 = vmatpush1.msra.mxu0 %v1788
        %1790 = vmatprep.subr.mxu0 0.0
        %v1791 = vand.u32 %v1616, 4294901760
        %1792 = vmatpush1.msra.mxu0 %v1791
        %1793 = vmatprep.subr.mxu0 0.0
        %v1794 = vand.u32 %v1617, 4294901760
        %1795 = vmatpush1.msra.mxu0 %v1794
        %1796 = vmatprep.subr.mxu0 0.0
        %v1797 = vand.u32 %v1618, 4294901760
        %1798 = vmatpush1.msra.mxu0 %v1797
        %1799 = vmatprep.subr.mxu0 0.0
        %v1800 = vand.u32 %v1619, 4294901760
        %1801 = vmatpush1.msra.mxu0 %v1800
        %1802 = vmatprep.subr.mxu0 0.0
        %v1803 = vand.u32 %v1620, 4294901760
        %1804 = vmatpush1.msra.mxu0 %v1803
        %1805 = vmatprep.subr.mxu0 0.0
        %v1806 = vand.u32 %v1621, 4294901760
        %1807 = vmatpush1.msra.mxu0 %v1806
        %v1808 = vand.u32 %v1709, 4294901760
        %v1809 = vsub.f32 %v1709, %v1808
        %v1810 = vand.u32 %v1809, 4294901760
        %v1811 = vsub.f32 %v1809, %v1810
        %v1812 = vand.u32 %v1811, 4294901760
        %1813 = vmatprep.mubr.f32.mxu0 %v1812
        %v1814 = vand.u32 %v1708, 4294901760
        %v1815 = vsub.f32 %v1708, %v1814
        %v1816 = vand.u32 %v1815, 4294901760
        %v1817 = vsub.f32 %v1815, %v1816
        %v1818 = vand.u32 %v1817, 4294901760
        %1819 = vmatmul.mubr.f32.gmra.mrb[0].mxu0 %v1818
        %v1820 = vpop.f32.mrb[0].mxu0
        %v1821 = vadd.f32 0.0, %v1820
        %v1822 = vpop.f32.mrb[0].mxu0
        %v1823 = vand.u32 %v1711, 4294901760
        %v1824 = vsub.f32 %v1711, %v1823
        %v1825 = vand.u32 %v1824, 4294901760
        %v1826 = vsub.f32 %v1824, %v1825
        %v1827 = vand.u32 %v1826, 4294901760
        %1828 = vmatprep.mubr.f32.mxu0 %v1827
        %v1829 = vand.u32 %v1710, 4294901760
        %v1830 = vsub.f32 %v1710, %v1829
        %v1831 = vand.u32 %v1830, 4294901760
        %v1832 = vsub.f32 %v1830, %v1831
        %v1833 = vand.u32 %v1832, 4294901760
        %1834 = vmatmul.mubr.f32.gmra.mrb[0].mxu0 %v1833
        %v1835 = vpop.f32.mrb[0].mxu0
        %v1836 = vadd.f32 0.0, %v1835
        %v1837 = vpop.f32.mrb[0].mxu0
        %1838 = vdwg.mxu0
        %1839 = vmatprep.subr.mxu0 0.0
        %v1840 = vand.u32 %v1590, 4294901760
        %v1841 = vsub.f32 %v1590, %v1840
        %v1842 = vand.u32 %v1841, 4294901760
        %v1843 = vsub.f32 %v1841, %v1842
        %v1844 = vand.u32 %v1843, 4294901760
        %1845 = vmatpush1.msra.mxu0 %v1844
        %1846 = vmatprep.subr.mxu0 0.0
        %v1847 = vand.u32 %v1591, 4294901760
        %v1848 = vsub.f32 %v1591, %v1847
        %v1849 = vand.u32 %v1848, 4294901760
        %v1850 = vsub.f32 %v1848, %v1849
        %v1851 = vand.u32 %v1850, 4294901760
        %1852 = vmatpush1.msra.mxu0 %v1851
        %1853 = vmatprep.subr.mxu0 0.0
        %v1854 = vand.u32 %v1592, 4294901760
        %v1855 = vsub.f32 %v1592, %v1854
        %v1856 = vand.u32 %v1855, 4294901760
        %v1857 = vsub.f32 %v1855, %v1856
        %v1858 = vand.u32 %v1857, 4294901760
        %1859 = vmatpush1.msra.mxu0 %v1858
        %1860 = vmatprep.subr.mxu0 0.0
        %v1861 = vand.u32 %v1593, 4294901760
        %v1862 = vsub.f32 %v1593, %v1861
        %v1863 = vand.u32 %v1862, 4294901760
        %v1864 = vsub.f32 %v1862, %v1863
        %v1865 = vand.u32 %v1864, 4294901760
        %1866 = vmatpush1.msra.mxu0 %v1865
        %1867 = vmatprep.subr.mxu0 0.0
        %v1868 = vand.u32 %v1594, 4294901760
        %v1869 = vsub.f32 %v1594, %v1868
        %v1870 = vand.u32 %v1869, 4294901760
        %v1871 = vsub.f32 %v1869, %v1870
        %v1872 = vand.u32 %v1871, 4294901760
        %1873 = vmatpush1.msra.mxu0 %v1872
        %1874 = vmatprep.subr.mxu0 0.0
        %v1875 = vand.u32 %v1595, 4294901760
        %v1876 = vsub.f32 %v1595, %v1875
        %v1877 = vand.u32 %v1876, 4294901760
        %v1878 = vsub.f32 %v1876, %v1877
        %v1879 = vand.u32 %v1878, 4294901760
        %1880 = vmatpush1.msra.mxu0 %v1879
        %1881 = vmatprep.subr.mxu0 0.0
        %v1882 = vand.u32 %v1596, 4294901760
        %v1883 = vsub.f32 %v1596, %v1882
        %v1884 = vand.u32 %v1883, 4294901760
        %v1885 = vsub.f32 %v1883, %v1884
        %v1886 = vand.u32 %v1885, 4294901760
        %1887 = vmatpush1.msra.mxu0 %v1886
        %1888 = vmatprep.subr.mxu0 0.0
        %v1889 = vand.u32 %v1597, 4294901760
        %v1890 = vsub.f32 %v1597, %v1889
        %v1891 = vand.u32 %v1890, 4294901760
        %v1892 = vsub.f32 %v1890, %v1891
        %v1893 = vand.u32 %v1892, 4294901760
        %1894 = vmatpush1.msra.mxu0 %v1893
        %1895 = vmatprep.subr.mxu0 0.0
        %v1896 = vand.u32 %v1598, 4294901760
        %v1897 = vsub.f32 %v1598, %v1896
        %v1898 = vand.u32 %v1897, 4294901760
        %v1899 = vsub.f32 %v1897, %v1898
        %v1900 = vand.u32 %v1899, 4294901760
        %1901 = vmatpush1.msra.mxu0 %v1900
        %1902 = vmatprep.subr.mxu0 0.0
        %v1903 = vand.u32 %v1599, 4294901760
        %v1904 = vsub.f32 %v1599, %v1903
        %v1905 = vand.u32 %v1904, 4294901760
        %v1906 = vsub.f32 %v1904, %v1905
        %v1907 = vand.u32 %v1906, 4294901760
        %1908 = vmatpush1.msra.mxu0 %v1907
        %1909 = vmatprep.subr.mxu0 0.0
        %v1910 = vand.u32 %v1600, 4294901760
        %v1911 = vsub.f32 %v1600, %v1910
        %v1912 = vand.u32 %v1911, 4294901760
        %v1913 = vsub.f32 %v1911, %v1912
        %v1914 = vand.u32 %v1913, 4294901760
        %1915 = vmatpush1.msra.mxu0 %v1914
        %1916 = vmatprep.subr.mxu0 0.0
        %v1917 = vand.u32 %v1601, 4294901760
        %v1918 = vsub.f32 %v1601, %v1917
        %v1919 = vand.u32 %v1918, 4294901760
        %v1920 = vsub.f32 %v1918, %v1919
        %v1921 = vand.u32 %v1920, 4294901760
        %1922 = vmatpush1.msra.mxu0 %v1921
        %1923 = vmatprep.subr.mxu0 0.0
        %v1924 = vand.u32 %v1602, 4294901760
        %v1925 = vsub.f32 %v1602, %v1924
        %v1926 = vand.u32 %v1925, 4294901760
        %v1927 = vsub.f32 %v1925, %v1926
        %v1928 = vand.u32 %v1927, 4294901760
        %1929 = vmatpush1.msra.mxu0 %v1928
        %1930 = vmatprep.subr.mxu0 0.0
        %v1931 = vand.u32 %v1603, 4294901760
        %v1932 = vsub.f32 %v1603, %v1931
        %v1933 = vand.u32 %v1932, 4294901760
        %v1934 = vsub.f32 %v1932, %v1933
        %v1935 = vand.u32 %v1934, 4294901760
        %1936 = vmatpush1.msra.mxu0 %v1935
        %1937 = vmatprep.subr.mxu0 0.0
        %v1938 = vand.u32 %v1604, 4294901760
        %v1939 = vsub.f32 %v1604, %v1938
        %v1940 = vand.u32 %v1939, 4294901760
        %v1941 = vsub.f32 %v1939, %v1940
        %v1942 = vand.u32 %v1941, 4294901760
        %1943 = vmatpush1.msra.mxu0 %v1942
        %1944 = vmatprep.subr.mxu0 0.0
        %v1945 = vand.u32 %v1605, 4294901760
        %v1946 = vsub.f32 %v1605, %v1945
        %v1947 = vand.u32 %v1946, 4294901760
        %v1948 = vsub.f32 %v1946, %v1947
        %v1949 = vand.u32 %v1948, 4294901760
        %1950 = vmatpush1.msra.mxu0 %v1949
        %1951 = vmatprep.subr.mxu0 0.0
        %v1952 = vand.u32 %v1606, 4294901760
        %v1953 = vsub.f32 %v1606, %v1952
        %v1954 = vand.u32 %v1953, 4294901760
        %v1955 = vsub.f32 %v1953, %v1954
        %v1956 = vand.u32 %v1955, 4294901760
        %1957 = vmatpush1.msra.mxu0 %v1956
        %1958 = vmatprep.subr.mxu0 0.0
        %v1959 = vand.u32 %v1607, 4294901760
        %v1960 = vsub.f32 %v1607, %v1959
        %v1961 = vand.u32 %v1960, 4294901760
        %v1962 = vsub.f32 %v1960, %v1961
        %v1963 = vand.u32 %v1962, 4294901760
        %1964 = vmatpush1.msra.mxu0 %v1963
        %1965 = vmatprep.subr.mxu0 0.0
        %v1966 = vand.u32 %v1608, 4294901760
        %v1967 = vsub.f32 %v1608, %v1966
        %v1968 = vand.u32 %v1967, 4294901760
        %v1969 = vsub.f32 %v1967, %v1968
        %v1970 = vand.u32 %v1969, 4294901760
        %1971 = vmatpush1.msra.mxu0 %v1970
        %1972 = vmatprep.subr.mxu0 0.0
        %v1973 = vand.u32 %v1609, 4294901760
        %v1974 = vsub.f32 %v1609, %v1973
        %v1975 = vand.u32 %v1974, 4294901760
        %v1976 = vsub.f32 %v1974, %v1975
        %v1977 = vand.u32 %v1976, 4294901760
        %1978 = vmatpush1.msra.mxu0 %v1977
        %1979 = vmatprep.subr.mxu0 0.0
        %v1980 = vand.u32 %v1610, 4294901760
        %v1981 = vsub.f32 %v1610, %v1980
        %v1982 = vand.u32 %v1981, 4294901760
        %v1983 = vsub.f32 %v1981, %v1982
        %v1984 = vand.u32 %v1983, 4294901760
        %1985 = vmatpush1.msra.mxu0 %v1984
        %1986 = vmatprep.subr.mxu0 0.0
        %v1987 = vand.u32 %v1611, 4294901760
        %v1988 = vsub.f32 %v1611, %v1987
        %v1989 = vand.u32 %v1988, 4294901760
        %v1990 = vsub.f32 %v1988, %v1989
        %v1991 = vand.u32 %v1990, 4294901760
        %1992 = vmatpush1.msra.mxu0 %v1991
        %1993 = vmatprep.subr.mxu0 0.0
        %v1994 = vand.u32 %v1612, 4294901760
        %v1995 = vsub.f32 %v1612, %v1994
        %v1996 = vand.u32 %v1995, 4294901760
        %v1997 = vsub.f32 %v1995, %v1996
        %v1998 = vand.u32 %v1997, 4294901760
        %1999 = vmatpush1.msra.mxu0 %v1998
        %2000 = vmatprep.subr.mxu0 0.0
        %v2001 = vand.u32 %v1613, 4294901760
        %v2002 = vsub.f32 %v1613, %v2001
        %v2003 = vand.u32 %v2002, 4294901760
        %v2004 = vsub.f32 %v2002, %v2003
        %v2005 = vand.u32 %v2004, 4294901760
        %2006 = vmatpush1.msra.mxu0 %v2005
        %2007 = vmatprep.subr.mxu0 0.0
        %v2008 = vand.u32 %v1614, 4294901760
        %v2009 = vsub.f32 %v1614, %v2008
        %v2010 = vand.u32 %v2009, 4294901760
        %v2011 = vsub.f32 %v2009, %v2010
        %v2012 = vand.u32 %v2011, 4294901760
        %2013 = vmatpush1.msra.mxu0 %v2012
        %2014 = vmatprep.subr.mxu0 0.0
        %v2015 = vand.u32 %v1615, 4294901760
        %v2016 = vsub.f32 %v1615, %v2015
        %v2017 = vand.u32 %v2016, 4294901760
        %v2018 = vsub.f32 %v2016, %v2017
        %v2019 = vand.u32 %v2018, 4294901760
        %2020 = vmatpush1.msra.mxu0 %v2019
        %2021 = vmatprep.subr.mxu0 0.0
        %v2022 = vand.u32 %v1616, 4294901760
        %v2023 = vsub.f32 %v1616, %v2022
        %v2024 = vand.u32 %v2023, 4294901760
        %v2025 = vsub.f32 %v2023, %v2024
        %v2026 = vand.u32 %v2025, 4294901760
        %2027 = vmatpush1.msra.mxu0 %v2026
        %2028 = vmatprep.subr.mxu0 0.0
        %v2029 = vand.u32 %v1617, 4294901760
        %v2030 = vsub.f32 %v1617, %v2029
        %v2031 = vand.u32 %v2030, 4294901760
        %v2032 = vsub.f32 %v2030, %v2031
        %v2033 = vand.u32 %v2032, 4294901760
        %2034 = vmatpush1.msra.mxu0 %v2033
        %2035 = vmatprep.subr.mxu0 0.0
        %v2036 = vand.u32 %v1618, 4294901760
        %v2037 = vsub.f32 %v1618, %v2036
        %v2038 = vand.u32 %v2037, 4294901760
        %v2039 = vsub.f32 %v2037, %v2038
        %v2040 = vand.u32 %v2039, 4294901760
        %2041 = vmatpush1.msra.mxu0 %v2040
        %2042 = vmatprep.subr.mxu0 0.0
        %v2043 = vand.u32 %v1619, 4294901760
        %v2044 = vsub.f32 %v1619, %v2043
        %v2045 = vand.u32 %v2044, 4294901760
        %v2046 = vsub.f32 %v2044, %v2045
        %v2047 = vand.u32 %v2046, 4294901760
        %2048 = vmatpush1.msra.mxu0 %v2047
        %2049 = vmatprep.subr.mxu0 0.0
        %v2050 = vand.u32 %v1620, 4294901760
        %v2051 = vsub.f32 %v1620, %v2050
        %v2052 = vand.u32 %v2051, 4294901760
        %v2053 = vsub.f32 %v2051, %v2052
        %v2054 = vand.u32 %v2053, 4294901760
        %2055 = vmatpush1.msra.mxu0 %v2054
        %2056 = vmatprep.subr.mxu0 0.0
        %v2057 = vand.u32 %v1621, 4294901760
        %v2058 = vsub.f32 %v1621, %v2057
        %v2059 = vand.u32 %v2058, 4294901760
        %v2060 = vsub.f32 %v2058, %v2059
        %v2061 = vand.u32 %v2060, 4294901760
        %2062 = vmatpush1.msra.mxu0 %v2061
        %v2063 = vand.u32 %v1709, 4294901760
        %2064 = vmatprep.mubr.f32.mxu0 %v2063
        %v2065 = vand.u32 %v1708, 4294901760
        %2066 = vmatmul.mubr.f32.gmra.mrb[0].mxu0 %v2065
        %v2067 = vpop.f32.mrb[0].mxu0
        %v2068 = vadd.f32 %v1821, %v2067
        %v2069 = vpop.f32.mrb[0].mxu0
        %v2070 = vand.u32 %v1711, 4294901760
        %2071 = vmatprep.mubr.f32.mxu0 %v2070
        %v2072 = vand.u32 %v1710, 4294901760
        %2073 = vmatmul.mubr.f32.gmra.mrb[0].mxu0 %v2072
        %v2074 = vpop.f32.mrb[0].mxu0
        %v2075 = vadd.f32 %v1836, %v2074
        %v2076 = vpop.f32.mrb[0].mxu0
        %2077 = vdwg.mxu0
        %2078 = vmatprep.subr.mxu0 0.0
        %v2079 = vand.u32 %v1590, 4294901760
        %v2080 = vsub.f32 %v1590, %v2079
        %2081 = vmatpush1.msra.mxu0 %v2080
        %2082 = vmatprep.subr.mxu0 0.0
        %v2083 = vand.u32 %v1591, 4294901760
        %v2084 = vsub.f32 %v1591, %v2083
        %2085 = vmatpush1.msra.mxu0 %v2084
        %2086 = vmatprep.subr.mxu0 0.0
        %v2087 = vand.u32 %v1592, 4294901760
        %v2088 = vsub.f32 %v1592, %v2087
        %2089 = vmatpush1.msra.mxu0 %v2088
        %2090 = vmatprep.subr.mxu0 0.0
        %v2091 = vand.u32 %v1593, 4294901760
        %v2092 = vsub.f32 %v1593, %v2091
        %2093 = vmatpush1.msra.mxu0 %v2092
        %2094 = vmatprep.subr.mxu0 0.0
        %v2095 = vand.u32 %v1594, 4294901760
        %v2096 = vsub.f32 %v1594, %v2095
        %2097 = vmatpush1.msra.mxu0 %v2096
        %2098 = vmatprep.subr.mxu0 0.0
        %v2099 = vand.u32 %v1595, 4294901760
        %v2100 = vsub.f32 %v1595, %v2099
        %2101 = vmatpush1.msra.mxu0 %v2100
        %2102 = vmatprep.subr.mxu0 0.0
        %v2103 = vand.u32 %v1596, 4294901760
        %v2104 = vsub.f32 %v1596, %v2103
        %2105 = vmatpush1.msra.mxu0 %v2104
        %2106 = vmatprep.subr.mxu0 0.0
        %v2107 = vand.u32 %v1597, 4294901760
        %v2108 = vsub.f32 %v1597, %v2107
        %2109 = vmatpush1.msra.mxu0 %v2108
        %2110 = vmatprep.subr.mxu0 0.0
        %v2111 = vand.u32 %v1598, 4294901760
        %v2112 = vsub.f32 %v1598, %v2111
        %2113 = vmatpush1.msra.mxu0 %v2112
        %2114 = vmatprep.subr.mxu0 0.0
        %v2115 = vand.u32 %v1599, 4294901760
        %v2116 = vsub.f32 %v1599, %v2115
        %2117 = vmatpush1.msra.mxu0 %v2116
        %2118 = vmatprep.subr.mxu0 0.0
        %v2119 = vand.u32 %v1600, 4294901760
        %v2120 = vsub.f32 %v1600, %v2119
        %2121 = vmatpush1.msra.mxu0 %v2120
        %2122 = vmatprep.subr.mxu0 0.0
        %v2123 = vand.u32 %v1601, 4294901760
        %v2124 = vsub.f32 %v1601, %v2123
        %2125 = vmatpush1.msra.mxu0 %v2124
        %2126 = vmatprep.subr.mxu0 0.0
        %v2127 = vand.u32 %v1602, 4294901760
        %v2128 = vsub.f32 %v1602, %v2127
        %2129 = vmatpush1.msra.mxu0 %v2128
        %2130 = vmatprep.subr.mxu0 0.0
        %v2131 = vand.u32 %v1603, 4294901760
        %v2132 = vsub.f32 %v1603, %v2131
        %2133 = vmatpush1.msra.mxu0 %v2132
        %2134 = vmatprep.subr.mxu0 0.0
        %v2135 = vand.u32 %v1604, 4294901760
        %v2136 = vsub.f32 %v1604, %v2135
        %2137 = vmatpush1.msra.mxu0 %v2136
        %2138 = vmatprep.subr.mxu0 0.0
        %v2139 = vand.u32 %v1605, 4294901760
        %v2140 = vsub.f32 %v1605, %v2139
        %2141 = vmatpush1.msra.mxu0 %v2140
        %2142 = vmatprep.subr.mxu0 0.0
        %v2143 = vand.u32 %v1606, 4294901760
        %v2144 = vsub.f32 %v1606, %v2143
        %2145 = vmatpush1.msra.mxu0 %v2144
        %2146 = vmatprep.subr.mxu0 0.0
        %v2147 = vand.u32 %v1607, 4294901760
        %v2148 = vsub.f32 %v1607, %v2147
        %2149 = vmatpush1.msra.mxu0 %v2148
        %2150 = vmatprep.subr.mxu0 0.0
        %v2151 = vand.u32 %v1608, 4294901760
        %v2152 = vsub.f32 %v1608, %v2151
        %2153 = vmatpush1.msra.mxu0 %v2152
        %2154 = vmatprep.subr.mxu0 0.0
        %v2155 = vand.u32 %v1609, 4294901760
        %v2156 = vsub.f32 %v1609, %v2155
        %2157 = vmatpush1.msra.mxu0 %v2156
        %2158 = vmatprep.subr.mxu0 0.0
        %v2159 = vand.u32 %v1610, 4294901760
        %v2160 = vsub.f32 %v1610, %v2159
        %2161 = vmatpush1.msra.mxu0 %v2160
        %2162 = vmatprep.subr.mxu0 0.0
        %v2163 = vand.u32 %v1611, 4294901760
        %v2164 = vsub.f32 %v1611, %v2163
        %2165 = vmatpush1.msra.mxu0 %v2164
        %2166 = vmatprep.subr.mxu0 0.0
        %v2167 = vand.u32 %v1612, 4294901760
        %v2168 = vsub.f32 %v1612, %v2167
        %2169 = vmatpush1.msra.mxu0 %v2168
        %2170 = vmatprep.subr.mxu0 0.0
        %v2171 = vand.u32 %v1613, 4294901760
        %v2172 = vsub.f32 %v1613, %v2171
        %2173 = vmatpush1.msra.mxu0 %v2172
        %2174 = vmatprep.subr.mxu0 0.0
        %v2175 = vand.u32 %v1614, 4294901760
        %v2176 = vsub.f32 %v1614, %v2175
        %2177 = vmatpush1.msra.mxu0 %v2176
        %2178 = vmatprep.subr.mxu0 0.0
        %v2179 = vand.u32 %v1615, 4294901760
        %v2180 = vsub.f32 %v1615, %v2179
        %2181 = vmatpush1.msra.mxu0 %v2180
        %2182 = vmatprep.subr.mxu0 0.0
        %v2183 = vand.u32 %v1616, 4294901760
        %v2184 = vsub.f32 %v1616, %v2183
        %2185 = vmatpush1.msra.mxu0 %v2184
        %2186 = vmatprep.subr.mxu0 0.0
        %v2187 = vand.u32 %v1617, 4294901760
        %v2188 = vsub.f32 %v1617, %v2187
        %2189 = vmatpush1.msra.mxu0 %v2188
        %2190 = vmatprep.subr.mxu0 0.0
        %v2191 = vand.u32 %v1618, 4294901760
        %v2192 = vsub.f32 %v1618, %v2191
        %2193 = vmatpush1.msra.mxu0 %v2192
        %2194 = vmatprep.subr.mxu0 0.0
        %v2195 = vand.u32 %v1619, 4294901760
        %v2196 = vsub.f32 %v1619, %v2195
        %2197 = vmatpush1.msra.mxu0 %v2196
        %2198 = vmatprep.subr.mxu0 0.0
        %v2199 = vand.u32 %v1620, 4294901760
        %v2200 = vsub.f32 %v1620, %v2199
        %2201 = vmatpush1.msra.mxu0 %v2200
        %2202 = vmatprep.subr.mxu0 0.0
        %v2203 = vand.u32 %v1621, 4294901760
        %v2204 = vsub.f32 %v1621, %v2203
        %2205 = vmatpush1.msra.mxu0 %v2204
        %v2206 = vand.u32 %v1709, 4294901760
        %v2207 = vsub.f32 %v1709, %v2206
        %2208 = vmatprep.mubr.f32.mxu0 %v2207
        %v2209 = vand.u32 %v1708, 4294901760
        %v2210 = vsub.f32 %v1708, %v2209
        %2211 = vmatmul.mubr.f32.gmra.mrb[0].mxu0 %v2210
        %v2212 = vpop.f32.mrb[0].mxu0
        %v2213 = vadd.f32 %v2068, %v2212
        %v2214 = vpop.f32.mrb[0].mxu0
        %v2215 = vand.u32 %v1711, 4294901760
        %v2216 = vsub.f32 %v1711, %v2215
        %2217 = vmatprep.mubr.f32.mxu0 %v2216
        %v2218 = vand.u32 %v1710, 4294901760
        %v2219 = vsub.f32 %v1710, %v2218
        %2220 = vmatmul.mubr.f32.gmra.mrb[0].mxu0 %v2219
        %v2221 = vpop.f32.mrb[0].mxu0
        %v2222 = vadd.f32 %v2075, %v2221
        %v2223 = vpop.f32.mrb[0].mxu0
        %2224 = vdwg.mxu0
        %2225 = vmatprep.subr.mxu0 0.0
        %v2226 = vand.u32 %v1590, 4294901760
        %2227 = vmatpush1.msra.mxu0 %v2226
        %2228 = vmatprep.subr.mxu0 0.0
        %v2229 = vand.u32 %v1591, 4294901760
        %2230 = vmatpush1.msra.mxu0 %v2229
        %2231 = vmatprep.subr.mxu0 0.0
        %v2232 = vand.u32 %v1592, 4294901760
        %2233 = vmatpush1.msra.mxu0 %v2232
        %2234 = vmatprep.subr.mxu0 0.0
        %v2235 = vand.u32 %v1593, 4294901760
        %2236 = vmatpush1.msra.mxu0 %v2235
        %2237 = vmatprep.subr.mxu0 0.0
        %v2238 = vand.u32 %v1594, 4294901760
        %2239 = vmatpush1.msra.mxu0 %v2238
        %2240 = vmatprep.subr.mxu0 0.0
        %v2241 = vand.u32 %v1595, 4294901760
        %2242 = vmatpush1.msra.mxu0 %v2241
        %2243 = vmatprep.subr.mxu0 0.0
        %v2244 = vand.u32 %v1596, 4294901760
        %2245 = vmatpush1.msra.mxu0 %v2244
        %2246 = vmatprep.subr.mxu0 0.0
        %v2247 = vand.u32 %v1597, 4294901760
        %2248 = vmatpush1.msra.mxu0 %v2247
        %2249 = vmatprep.subr.mxu0 0.0
        %v2250 = vand.u32 %v1598, 4294901760
        %2251 = vmatpush1.msra.mxu0 %v2250
        %2252 = vmatprep.subr.mxu0 0.0
        %v2253 = vand.u32 %v1599, 4294901760
        %2254 = vmatpush1.msra.mxu0 %v2253
        %2255 = vmatprep.subr.mxu0 0.0
        %v2256 = vand.u32 %v1600, 4294901760
        %2257 = vmatpush1.msra.mxu0 %v2256
        %2258 = vmatprep.subr.mxu0 0.0
        %v2259 = vand.u32 %v1601, 4294901760
        %2260 = vmatpush1.msra.mxu0 %v2259
        %2261 = vmatprep.subr.mxu0 0.0
        %v2262 = vand.u32 %v1602, 4294901760
        %2263 = vmatpush1.msra.mxu0 %v2262
        %2264 = vmatprep.subr.mxu0 0.0
        %v2265 = vand.u32 %v1603, 4294901760
        %2266 = vmatpush1.msra.mxu0 %v2265
        %2267 = vmatprep.subr.mxu0 0.0
        %v2268 = vand.u32 %v1604, 4294901760
        %2269 = vmatpush1.msra.mxu0 %v2268
        %2270 = vmatprep.subr.mxu0 0.0
        %v2271 = vand.u32 %v1605, 4294901760
        %2272 = vmatpush1.msra.mxu0 %v2271
        %2273 = vmatprep.subr.mxu0 0.0
        %v2274 = vand.u32 %v1606, 4294901760
        %2275 = vmatpush1.msra.mxu0 %v2274
        %2276 = vmatprep.subr.mxu0 0.0
        %v2277 = vand.u32 %v1607, 4294901760
        %2278 = vmatpush1.msra.mxu0 %v2277
        %2279 = vmatprep.subr.mxu0 0.0
        %v2280 = vand.u32 %v1608, 4294901760
        %2281 = vmatpush1.msra.mxu0 %v2280
        %2282 = vmatprep.subr.mxu0 0.0
        %v2283 = vand.u32 %v1609, 4294901760
        %2284 = vmatpush1.msra.mxu0 %v2283
        %2285 = vmatprep.subr.mxu0 0.0
        %v2286 = vand.u32 %v1610, 4294901760
        %2287 = vmatpush1.msra.mxu0 %v2286
        %2288 = vmatprep.subr.mxu0 0.0
        %v2289 = vand.u32 %v1611, 4294901760
        %2290 = vmatpush1.msra.mxu0 %v2289
        %2291 = vmatprep.subr.mxu0 0.0
        %v2292 = vand.u32 %v1612, 4294901760
        %2293 = vmatpush1.msra.mxu0 %v2292
        %2294 = vmatprep.subr.mxu0 0.0
        %v2295 = vand.u32 %v1613, 4294901760
        %2296 = vmatpush1.msra.mxu0 %v2295
        %2297 = vmatprep.subr.mxu0 0.0
        %v2298 = vand.u32 %v1614, 4294901760
        %2299 = vmatpush1.msra.mxu0 %v2298
        %2300 = vmatprep.subr.mxu0 0.0
        %v2301 = vand.u32 %v1615, 4294901760
        %2302 = vmatpush1.msra.mxu0 %v2301
        %2303 = vmatprep.subr.mxu0 0.0
        %v2304 = vand.u32 %v1616, 4294901760
        %2305 = vmatpush1.msra.mxu0 %v2304
        %2306 = vmatprep.subr.mxu0 0.0
        %v2307 = vand.u32 %v1617, 4294901760
        %2308 = vmatpush1.msra.mxu0 %v2307
        %2309 = vmatprep.subr.mxu0 0.0
        %v2310 = vand.u32 %v1618, 4294901760
        %2311 = vmatpush1.msra.mxu0 %v2310
        %2312 = vmatprep.subr.mxu0 0.0
        %v2313 = vand.u32 %v1619, 4294901760
        %2314 = vmatpush1.msra.mxu0 %v2313
        %2315 = vmatprep.subr.mxu0 0.0
        %v2316 = vand.u32 %v1620, 4294901760
        %2317 = vmatpush1.msra.mxu0 %v2316
        %2318 = vmatprep.subr.mxu0 0.0
        %v2319 = vand.u32 %v1621, 4294901760
        %2320 = vmatpush1.msra.mxu0 %v2319
        %v2321 = vand.u32 %v1709, 4294901760
        %v2322 = vsub.f32 %v1709, %v2321
        %v2323 = vand.u32 %v2322, 4294901760
        %2324 = vmatprep.mubr.f32.mxu0 %v2323
        %v2325 = vand.u32 %v1708, 4294901760
        %v2326 = vsub.f32 %v1708, %v2325
        %v2327 = vand.u32 %v2326, 4294901760
        %2328 = vmatmul.mubr.f32.gmra.mrb[0].mxu0 %v2327
        %v2329 = vpop.f32.mrb[0].mxu0
        %v2330 = vadd.f32 %v2213, %v2329
        %v2331 = vpop.f32.mrb[0].mxu0
        %v2332 = vand.u32 %v1711, 4294901760
        %v2333 = vsub.f32 %v1711, %v2332
        %v2334 = vand.u32 %v2333, 4294901760
        %2335 = vmatprep.mubr.f32.mxu0 %v2334
        %v2336 = vand.u32 %v1710, 4294901760
        %v2337 = vsub.f32 %v1710, %v2336
        %v2338 = vand.u32 %v2337, 4294901760
        %2339 = vmatmul.mubr.f32.gmra.mrb[0].mxu0 %v2338
        %v2340 = vpop.f32.mrb[0].mxu0
        %v2341 = vadd.f32 %v2222, %v2340
        %v2342 = vpop.f32.mrb[0].mxu0
        %2343 = vdwg.mxu0
        %2344 = vmatprep.subr.mxu0 0.0
        %v2345 = vand.u32 %v1590, 4294901760
        %v2346 = vsub.f32 %v1590, %v2345
        %v2347 = vand.u32 %v2346, 4294901760
        %2348 = vmatpush1.msra.mxu0 %v2347
        %2349 = vmatprep.subr.mxu0 0.0
        %v2350 = vand.u32 %v1591, 4294901760
        %v2351 = vsub.f32 %v1591, %v2350
        %v2352 = vand.u32 %v2351, 4294901760
        %2353 = vmatpush1.msra.mxu0 %v2352
        %2354 = vmatprep.subr.mxu0 0.0
        %v2355 = vand.u32 %v1592, 4294901760
        %v2356 = vsub.f32 %v1592, %v2355
        %v2357 = vand.u32 %v2356, 4294901760
        %2358 = vmatpush1.msra.mxu0 %v2357
        %2359 = vmatprep.subr.mxu0 0.0
        %v2360 = vand.u32 %v1593, 4294901760
        %v2361 = vsub.f32 %v1593, %v2360
        %v2362 = vand.u32 %v2361, 4294901760
        %2363 = vmatpush1.msra.mxu0 %v2362
        %2364 = vmatprep.subr.mxu0 0.0
        %v2365 = vand.u32 %v1594, 4294901760
        %v2366 = vsub.f32 %v1594, %v2365
        %v2367 = vand.u32 %v2366, 4294901760
        %2368 = vmatpush1.msra.mxu0 %v2367
        %2369 = vmatprep.subr.mxu0 0.0
        %v2370 = vand.u32 %v1595, 4294901760
        %v2371 = vsub.f32 %v1595, %v2370
        %v2372 = vand.u32 %v2371, 4294901760
        %2373 = vmatpush1.msra.mxu0 %v2372
        %2374 = vmatprep.subr.mxu0 0.0
        %v2375 = vand.u32 %v1596, 4294901760
        %v2376 = vsub.f32 %v1596, %v2375
        %v2377 = vand.u32 %v2376, 4294901760
        %2378 = vmatpush1.msra.mxu0 %v2377
        %2379 = vmatprep.subr.mxu0 0.0
        %v2380 = vand.u32 %v1597, 4294901760
        %v2381 = vsub.f32 %v1597, %v2380
        %v2382 = vand.u32 %v2381, 4294901760
        %2383 = vmatpush1.msra.mxu0 %v2382
        %2384 = vmatprep.subr.mxu0 0.0
        %v2385 = vand.u32 %v1598, 4294901760
        %v2386 = vsub.f32 %v1598, %v2385
        %v2387 = vand.u32 %v2386, 4294901760
        %2388 = vmatpush1.msra.mxu0 %v2387
        %2389 = vmatprep.subr.mxu0 0.0
        %v2390 = vand.u32 %v1599, 4294901760
        %v2391 = vsub.f32 %v1599, %v2390
        %v2392 = vand.u32 %v2391, 4294901760
        %2393 = vmatpush1.msra.mxu0 %v2392
        %2394 = vmatprep.subr.mxu0 0.0
        %v2395 = vand.u32 %v1600, 4294901760
        %v2396 = vsub.f32 %v1600, %v2395
        %v2397 = vand.u32 %v2396, 4294901760
        %2398 = vmatpush1.msra.mxu0 %v2397
        %2399 = vmatprep.subr.mxu0 0.0
        %v2400 = vand.u32 %v1601, 4294901760
        %v2401 = vsub.f32 %v1601, %v2400
        %v2402 = vand.u32 %v2401, 4294901760
        %2403 = vmatpush1.msra.mxu0 %v2402
        %2404 = vmatprep.subr.mxu0 0.0
        %v2405 = vand.u32 %v1602, 4294901760
        %v2406 = vsub.f32 %v1602, %v2405
        %v2407 = vand.u32 %v2406, 4294901760
        %2408 = vmatpush1.msra.mxu0 %v2407
        %2409 = vmatprep.subr.mxu0 0.0
        %v2410 = vand.u32 %v1603, 4294901760
        %v2411 = vsub.f32 %v1603, %v2410
        %v2412 = vand.u32 %v2411, 4294901760
        %2413 = vmatpush1.msra.mxu0 %v2412
        %2414 = vmatprep.subr.mxu0 0.0
        %v2415 = vand.u32 %v1604, 4294901760
        %v2416 = vsub.f32 %v1604, %v2415
        %v2417 = vand.u32 %v2416, 4294901760
        %2418 = vmatpush1.msra.mxu0 %v2417
        %2419 = vmatprep.subr.mxu0 0.0
        %v2420 = vand.u32 %v1605, 4294901760
        %v2421 = vsub.f32 %v1605, %v2420
        %v2422 = vand.u32 %v2421, 4294901760
        %2423 = vmatpush1.msra.mxu0 %v2422
        %2424 = vmatprep.subr.mxu0 0.0
        %v2425 = vand.u32 %v1606, 4294901760
        %v2426 = vsub.f32 %v1606, %v2425
        %v2427 = vand.u32 %v2426, 4294901760
        %2428 = vmatpush1.msra.mxu0 %v2427
        %2429 = vmatprep.subr.mxu0 0.0
        %v2430 = vand.u32 %v1607, 4294901760
        %v2431 = vsub.f32 %v1607, %v2430
        %v2432 = vand.u32 %v2431, 4294901760
        %2433 = vmatpush1.msra.mxu0 %v2432
        %2434 = vmatprep.subr.mxu0 0.0
        %v2435 = vand.u32 %v1608, 4294901760
        %v2436 = vsub.f32 %v1608, %v2435
        %v2437 = vand.u32 %v2436, 4294901760
        %2438 = vmatpush1.msra.mxu0 %v2437
        %2439 = vmatprep.subr.mxu0 0.0
        %v2440 = vand.u32 %v1609, 4294901760
        %v2441 = vsub.f32 %v1609, %v2440
        %v2442 = vand.u32 %v2441, 4294901760
        %2443 = vmatpush1.msra.mxu0 %v2442
        %2444 = vmatprep.subr.mxu0 0.0
        %v2445 = vand.u32 %v1610, 4294901760
        %v2446 = vsub.f32 %v1610, %v2445
        %v2447 = vand.u32 %v2446, 4294901760
        %2448 = vmatpush1.msra.mxu0 %v2447
        %2449 = vmatprep.subr.mxu0 0.0
        %v2450 = vand.u32 %v1611, 4294901760
        %v2451 = vsub.f32 %v1611, %v2450
        %v2452 = vand.u32 %v2451, 4294901760
        %2453 = vmatpush1.msra.mxu0 %v2452
        %2454 = vmatprep.subr.mxu0 0.0
        %v2455 = vand.u32 %v1612, 4294901760
        %v2456 = vsub.f32 %v1612, %v2455
        %v2457 = vand.u32 %v2456, 4294901760
        %2458 = vmatpush1.msra.mxu0 %v2457
        %2459 = vmatprep.subr.mxu0 0.0
        %v2460 = vand.u32 %v1613, 4294901760
        %v2461 = vsub.f32 %v1613, %v2460
        %v2462 = vand.u32 %v2461, 4294901760
        %2463 = vmatpush1.msra.mxu0 %v2462
        %2464 = vmatprep.subr.mxu0 0.0
        %v2465 = vand.u32 %v1614, 4294901760
        %v2466 = vsub.f32 %v1614, %v2465
        %v2467 = vand.u32 %v2466, 4294901760
        %2468 = vmatpush1.msra.mxu0 %v2467
        %2469 = vmatprep.subr.mxu0 0.0
        %v2470 = vand.u32 %v1615, 4294901760
        %v2471 = vsub.f32 %v1615, %v2470
        %v2472 = vand.u32 %v2471, 4294901760
        %2473 = vmatpush1.msra.mxu0 %v2472
        %2474 = vmatprep.subr.mxu0 0.0
        %v2475 = vand.u32 %v1616, 4294901760
        %v2476 = vsub.f32 %v1616, %v2475
        %v2477 = vand.u32 %v2476, 4294901760
        %2478 = vmatpush1.msra.mxu0 %v2477
        %2479 = vmatprep.subr.mxu0 0.0
        %v2480 = vand.u32 %v1617, 4294901760
        %v2481 = vsub.f32 %v1617, %v2480
        %v2482 = vand.u32 %v2481, 4294901760
        %2483 = vmatpush1.msra.mxu0 %v2482
        %2484 = vmatprep.subr.mxu0 0.0
        %v2485 = vand.u32 %v1618, 4294901760
        %v2486 = vsub.f32 %v1618, %v2485
        %v2487 = vand.u32 %v2486, 4294901760
        %2488 = vmatpush1.msra.mxu0 %v2487
        %2489 = vmatprep.subr.mxu0 0.0
        %v2490 = vand.u32 %v1619, 4294901760
        %v2491 = vsub.f32 %v1619, %v2490
        %v2492 = vand.u32 %v2491, 4294901760
        %2493 = vmatpush1.msra.mxu0 %v2492
        %2494 = vmatprep.subr.mxu0 0.0
        %v2495 = vand.u32 %v1620, 4294901760
        %v2496 = vsub.f32 %v1620, %v2495
        %v2497 = vand.u32 %v2496, 4294901760
        %2498 = vmatpush1.msra.mxu0 %v2497
        %2499 = vmatprep.subr.mxu0 0.0
        %v2500 = vand.u32 %v1621, 4294901760
        %v2501 = vsub.f32 %v1621, %v2500
        %v2502 = vand.u32 %v2501, 4294901760
        %2503 = vmatpush1.msra.mxu0 %v2502
        %v2504 = vand.u32 %v1709, 4294901760
        %2505 = vmatprep.mubr.f32.mxu0 %v2504
        %v2506 = vand.u32 %v1708, 4294901760
        %2507 = vmatmul.mubr.f32.gmra.mrb[0].mxu0 %v2506
        %v2508 = vpop.f32.mrb[0].mxu0
        %v2509 = vadd.f32 %v2330, %v2508
        %v2510 = vpop.f32.mrb[0].mxu0
        %v2511 = vand.u32 %v1711, 4294901760
        %2512 = vmatprep.mubr.f32.mxu0 %v2511
        %v2513 = vand.u32 %v1710, 4294901760
        %2514 = vmatmul.mubr.f32.gmra.mrb[0].mxu0 %v2513
        %v2515 = vpop.f32.mrb[0].mxu0
        %v2516 = vadd.f32 %v2341, %v2515
        %v2517 = vpop.f32.mrb[0].mxu0
        %2518 = vdwg.mxu0
        %2519 = vmatprep.subr.mxu0 0.0
        %v2520 = vand.u32 %v1590, 4294901760
        %2521 = vmatpush1.msra.mxu0 %v2520
        %2522 = vmatprep.subr.mxu0 0.0
        %v2523 = vand.u32 %v1591, 4294901760
        %2524 = vmatpush1.msra.mxu0 %v2523
        %2525 = vmatprep.subr.mxu0 0.0
        %v2526 = vand.u32 %v1592, 4294901760
        %2527 = vmatpush1.msra.mxu0 %v2526
        %2528 = vmatprep.subr.mxu0 0.0
        %v2529 = vand.u32 %v1593, 4294901760
        %2530 = vmatpush1.msra.mxu0 %v2529
        %2531 = vmatprep.subr.mxu0 0.0
        %v2532 = vand.u32 %v1594, 4294901760
        %2533 = vmatpush1.msra.mxu0 %v2532
        %2534 = vmatprep.subr.mxu0 0.0
        %v2535 = vand.u32 %v1595, 4294901760
        %2536 = vmatpush1.msra.mxu0 %v2535
        %2537 = vmatprep.subr.mxu0 0.0
        %v2538 = vand.u32 %v1596, 4294901760
        %2539 = vmatpush1.msra.mxu0 %v2538
        %2540 = vmatprep.subr.mxu0 0.0
        %v2541 = vand.u32 %v1597, 4294901760
        %2542 = vmatpush1.msra.mxu0 %v2541
        %2543 = vmatprep.subr.mxu0 0.0
        %v2544 = vand.u32 %v1598, 4294901760
        %2545 = vmatpush1.msra.mxu0 %v2544
        %2546 = vmatprep.subr.mxu0 0.0
        %v2547 = vand.u32 %v1599, 4294901760
        %2548 = vmatpush1.msra.mxu0 %v2547
        %2549 = vmatprep.subr.mxu0 0.0
        %v2550 = vand.u32 %v1600, 4294901760
        %2551 = vmatpush1.msra.mxu0 %v2550
        %2552 = vmatprep.subr.mxu0 0.0
        %v2553 = vand.u32 %v1601, 4294901760
        %2554 = vmatpush1.msra.mxu0 %v2553
        %2555 = vmatprep.subr.mxu0 0.0
        %v2556 = vand.u32 %v1602, 4294901760
        %2557 = vmatpush1.msra.mxu0 %v2556
        %2558 = vmatprep.subr.mxu0 0.0
        %v2559 = vand.u32 %v1603, 4294901760
        %2560 = vmatpush1.msra.mxu0 %v2559
        %2561 = vmatprep.subr.mxu0 0.0
        %v2562 = vand.u32 %v1604, 4294901760
        %2563 = vmatpush1.msra.mxu0 %v2562
        %2564 = vmatprep.subr.mxu0 0.0
        %v2565 = vand.u32 %v1605, 4294901760
        %2566 = vmatpush1.msra.mxu0 %v2565
        %2567 = vmatprep.subr.mxu0 0.0
        %v2568 = vand.u32 %v1606, 4294901760
        %2569 = vmatpush1.msra.mxu0 %v2568
        %2570 = vmatprep.subr.mxu0 0.0
        %v2571 = vand.u32 %v1607, 4294901760
        %2572 = vmatpush1.msra.mxu0 %v2571
        %2573 = vmatprep.subr.mxu0 0.0
        %v2574 = vand.u32 %v1608, 4294901760
        %2575 = vmatpush1.msra.mxu0 %v2574
        %2576 = vmatprep.subr.mxu0 0.0
        %v2577 = vand.u32 %v1609, 4294901760
        %2578 = vmatpush1.msra.mxu0 %v2577
        %2579 = vmatprep.subr.mxu0 0.0
        %v2580 = vand.u32 %v1610, 4294901760
        %2581 = vmatpush1.msra.mxu0 %v2580
        %2582 = vmatprep.subr.mxu0 0.0
        %v2583 = vand.u32 %v1611, 4294901760
        %2584 = vmatpush1.msra.mxu0 %v2583
        %2585 = vmatprep.subr.mxu0 0.0
        %v2586 = vand.u32 %v1612, 4294901760
        %2587 = vmatpush1.msra.mxu0 %v2586
        %2588 = vmatprep.subr.mxu0 0.0
        %v2589 = vand.u32 %v1613, 4294901760
        %2590 = vmatpush1.msra.mxu0 %v2589
        %2591 = vmatprep.subr.mxu0 0.0
        %v2592 = vand.u32 %v1614, 4294901760
        %2593 = vmatpush1.msra.mxu0 %v2592
        %2594 = vmatprep.subr.mxu0 0.0
        %v2595 = vand.u32 %v1615, 4294901760
        %2596 = vmatpush1.msra.mxu0 %v2595
        %2597 = vmatprep.subr.mxu0 0.0
        %v2598 = vand.u32 %v1616, 4294901760
        %2599 = vmatpush1.msra.mxu0 %v2598
        %2600 = vmatprep.subr.mxu0 0.0
        %v2601 = vand.u32 %v1617, 4294901760
        %2602 = vmatpush1.msra.mxu0 %v2601
        %2603 = vmatprep.subr.mxu0 0.0
        %v2604 = vand.u32 %v1618, 4294901760
        %2605 = vmatpush1.msra.mxu0 %v2604
        %2606 = vmatprep.subr.mxu0 0.0
        %v2607 = vand.u32 %v1619, 4294901760
        %2608 = vmatpush1.msra.mxu0 %v2607
        %2609 = vmatprep.subr.mxu0 0.0
        %v2610 = vand.u32 %v1620, 4294901760
        %2611 = vmatpush1.msra.mxu0 %v2610
        %2612 = vmatprep.subr.mxu0 0.0
        %v2613 = vand.u32 %v1621, 4294901760
        %2614 = vmatpush1.msra.mxu0 %v2613
        %v2615 = vand.u32 %v1709, 4294901760
        %2616 = vmatprep.mubr.f32.mxu0 %v2615
        %v2617 = vand.u32 %v1708, 4294901760
        %2618 = vmatmul.mubr.f32.gmra.mrb[0].mxu0 %v2617
        %v2619 = vpop.f32.mrb[0].mxu0
        %v2620 = vadd.f32 %v2509, %v2619
        %v2621 = vpop.f32.mrb[0].mxu0
        %v2622 = vand.u32 %v1711, 4294901760
        %2623 = vmatprep.mubr.f32.mxu0 %v2622
        %v2624 = vand.u32 %v1710, 4294901760
        %2625 = vmatmul.mubr.f32.gmra.mrb[0].mxu0 %v2624
        %v2626 = vpop.f32.mrb[0].mxu0
        %v2627 = vadd.f32 %v2516, %v2626
        %v2628 = vpop.f32.mrb[0].mxu0
        %2629 = vdwg.mxu0
        %v2630 = vadd.f32 %v1639, %v2620
        %v2631 = vadd.f32 %v1640, %v2627
        %vm2632 = vcmask 130048
        %2633 = vst.msk [vmem:[#allocation2] sm:$0xff] %vm2632, %v2630
        %2634 = vst.msk [vmem:[#allocation2 + $0x8] sm:$0xff] %vm2632, %v2631
        // Predicated region
        $region41: #{tpu_custom_call.1} parent=27 // pred_check
          %p2635 = pneg %p268
        $region42: #{tpu_custom_call.1} parent=27 // pred_check_branch
          %2637 = sbr.rel (%p2635) target = $region44
        $region43: #{tpu_custom_call.1} parent=27 // pred_region
          %v2638 = vld [vmem:[#allocation2] sm:$0xff]
          %v2639 = vld [vmem:[#allocation2 + $0x8] sm:$0xff]
          %2640 = vst.msk [vmem:[%s258] sm:$0xff] %vm2632, %v2638
          %2641 = vst.msk [vmem:[%s258 + $0x8] sm:$0xff] %vm2632, %v2639
          %vm2642 = vcmp.gt.f32.partialorder %v2638, 0.95
          %vm2643 = vcmp.gt.f32.partialorder %v2639, 0.95
          %v2644 = vsel %vm2642, 1, 0
          %v2645 = vsel %vm2643, 1, 0
          %v2646 = vcvt.s32.f32 %v2644
          %v2647 = vcvt.s32.f32 %v2645
          %2648 = vst.msk [vmem:[%s265] sm:$0xff] %vm2632, %v2646
          %2649 = vst.msk [vmem:[%s265 + $0x8] sm:$0xff] %vm2632, %v2647
        $region44: #{tpu_custom_call.1} parent=27 // pred_fallthru
          _
        %s2650 = sand.u32 %s111, 1
        %s2651 = scalar_lea.sflag [#allocation8], %s2650
        %s2652 = sand.u32 %s111, 1
        %s2653 = smul.addr %s2652, 16
        %s2654 = scalar_lea.vmem [#allocation11], %s2653
        %s2655 = sand.u32 %s137, 1
        %s2656 = scalar_lea.sflag [#allocation13], %s2655
        %s2657 = sand.u32 %s137, 1
        %s2658 = smul.addr %s2657, 16
        %s2659 = scalar_lea.vmem [#allocation12], %s2658
        // Predicated region
        $region45: #{tpu_custom_call.1} parent=27 // pred_check
          %p2660 = pneg %p121
        $region46: #{tpu_custom_call.1} parent=27 // pred_check_branch
          %2662 = sbr.rel (%p2660) target = $region48
        $region47: #{tpu_custom_call.1} parent=27 // pred_region
          %s2664 = ssub.s32 256, 256
          %2665 = vsyncadd %s2651, %s2664
          %s2666 = smul.addr %s39, 2
          %s2667 = smul.addr %s2666, 128
          %s2668 = scalar_lea.hbm %s4, %s2667
          %s2669 = sshll.u32 %s2654, 4
          %s2670 = int_to_ptr.vmem [resolvable:$true] %s2669
          %2675 = dma.vmem_to_hbm [thread:$0]  %s2670, 256, %s2668, %s2651, 128, 128, 8
        $region48: #{tpu_custom_call.1} parent=27 // pred_fallthru
          _
        // Predicated region
        $region49: #{tpu_custom_call.1} parent=27 // pred_check
          %p2676 = pneg %p147
        $region50: #{tpu_custom_call.1} parent=27 // pred_check_branch
          %2678 = sbr.rel (%p2676) target = $region52
        $region51: #{tpu_custom_call.1} parent=27 // pred_region
          %s2680 = ssub.s32 256, 256
          %2681 = vsyncadd %s2656, %s2680
          %s2682 = smul.addr %s39, 2
          %s2683 = smul.addr %s2682, 128
          %s2684 = scalar_lea.hbm %s5, %s2683
          %s2685 = sshll.u32 %s2659, 4
          %s2686 = int_to_ptr.vmem [resolvable:$true] %s2685
          %2691 = dma.vmem_to_hbm [thread:$0]  %s2686, 256, %s2684, %s2656, 128, 128, 8
        $region52: #{tpu_custom_call.1} parent=27 // pred_fallthru
          _
      $region28: #{tpu_custom_call.1} parent=5 // pred_fallthru
        _
      %p2692 = scmp.le.s32.totalorder 2, %s30
      // Predicated region
      $region53: #{tpu_custom_call.1} parent=5 // pred_check
        %p2693 = pneg %p2692
      $region54: #{tpu_custom_call.1} parent=5 // pred_check_branch
        %2695 = sbr.rel (%p2693) target = $region56
      $region55: #{tpu_custom_call.1} parent=5 // pred_region
        %s2696 = ssub.s32 %s30, 2
        // Predicated region
        $region57: #{tpu_custom_call.1} parent=55 // pred_check
          %p2697 = pneg %p127
        $region58: #{tpu_custom_call.1} parent=55 // pred_check_branch
          %2699 = sbr.rel (%p2697) target = $region60
        $region59: #{tpu_custom_call.1} parent=55 // pred_region
          %s2700 = sand.u32 %s112, 1
          %s2701 = scalar_lea.sflag [#allocation8], %s2700
          %s2702 = sand.u32 %s112, 1
          %s2703 = smul.addr %s2702, 16
          %s2704 = scalar_lea.vmem [#allocation11], %s2703
          %2705 = dma.done %s2701, 256
        $region60: #{tpu_custom_call.1} parent=55 // pred_fallthru
          _
        // Predicated region
        $region61: #{tpu_custom_call.1} parent=55 // pred_check
          %p2706 = pneg %p153
        $region62: #{tpu_custom_call.1} parent=55 // pred_check_branch
          %2708 = sbr.rel (%p2706) target = $region64
        $region63: #{tpu_custom_call.1} parent=55 // pred_region
          %s2709 = sand.u32 %s138, 1
          %s2710 = scalar_lea.sflag [#allocation13], %s2709
          %s2711 = sand.u32 %s138, 1
          %s2712 = smul.addr %s2711, 16
          %s2713 = scalar_lea.vmem [#allocation12], %s2712
          %2714 = dma.done %s2710, 256
        $region64: #{tpu_custom_call.1} parent=55 // pred_fallthru
          _
      $region56: #{tpu_custom_call.1} parent=5 // pred_fallthru
        _
    $region6: #{tpu_custom_call.1} parent=1 // loop_footer
      %s34 = sadd.s32 1, %s30
    $region7: #{tpu_custom_call.1} parent=1 // loop_footer_branch
      %29 = sbr.rel target = $region3
    $region8: #{tpu_custom_call.1} parent=1 // loop_exit
      _
    %2715 = vsyncpa [#allocation7], 1
    %s2716 = scalar_lea.sflag [#allocation7], 1
    %2717 = vsyncpa %s2716, 1
    %2718 = vsyncpa [#allocation10], 1
    %s2719 = scalar_lea.sflag [#allocation10], 1
    %2720 = vsyncpa %s2719, 1
    %2721 = vsyncpa [#allocation8], 1
    %s2722 = scalar_lea.sflag [#allocation8], 1
    %2723 = vsyncpa %s2722, 1
    %2724 = vsyncpa [#allocation13], 1
    %s2725 = scalar_lea.sflag [#allocation13], 1
    %2726 = vsyncpa %s2725, 1

</llo_original>
